<compile_context>
chip_gen: v5e
topology: v5e:2x2
jax: 0.10.0
libtpu: 0.0.40
codegen_flags: <defaults>
</compile_context>

<pallas_src>
import functools

import numpy as np
import jax
import jax.numpy as jnp
from jax.experimental import pallas as pl
from jax.experimental.pallas import tpu as pltpu

# ----------------------------- configuration --------------------------------
FS = 256            # synthetic sample rate (small)
AUDIO_DUR = 10      # seconds per chunk
OVERLAP_DUR = 3     # seconds hop between chunks
HOP = 64            # STFT hop length  (== label_encoder.frame_hop)
WIN = 128           # STFT window / n_fft
N_BINS = 64         # DFT bins kept
N_MELS = 64
HIDDEN = 128
N_CLASSES = 10      # len(classes_labels)
N_CLASSES_PAD = 128  # lane-dense padded class width used inside the kernel
NET_POOLING = 1     # net_subsample
MEDIAN_WINDOW = [3] * N_CLASSES
HARD_THRESHOLD = [0.5] * N_CLASSES

CHUNK_LEN = FS * AUDIO_DUR          # 2560 samples
STRIDE = FS * OVERLAP_DUR           # 768 samples
T_FRAMES = CHUNK_LEN // HOP         # 40 frames per chunk

assert WIN == 2 * HOP               # in-kernel framing relies on 50% overlap
assert CHUNK_LEN == T_FRAMES * HOP
assert T_FRAMES % 8 == 0            # keeps (CB,T,.)<->(CB*T,.) collapse cheap

# row offsets inside the packed bf16 weight slab (all multiples of 8)
R_DFT = 0
R_W1 = R_DFT + WIN                  # 128
R_W2 = R_W1 + N_MELS                # 192
R_W3 = R_W2 + HIDDEN                # 320
WMAT_ROWS = R_W3 + HIDDEN           # 448


def time2frame(t):
    return int(int(t / HOP) / NET_POOLING)


def _detect_tpu():
    """Trace-time chip heuristics: (#TensorCores>1, has bf16 VPU)."""
    try:
        kind = jax.devices()[0].device_kind.lower()
    except Exception:
        kind = ""
    multi_tc = any(s in kind for s in ("v3", "v4", "v5p", "v7"))
    bf16_vpu = any(s in kind for s in ("v6", "v7"))
    return multi_tc, bf16_vpu


# ------------------------------ Pallas kernel --------------------------------
def _atst_sed_block_kernel(pieces_ref, wmats_ref, mel_fb_ref, biases_ref,
                           feats_ref, strong_ref, *, bf16_square):
    cb, tp1, hop = pieces_ref.shape        # (CB, T+1, HOP), pieces in bf16
    t = tp1 - 1
    m = cb * t

    # ---- in-VMEM framing: frame[r] = [piece[r] | piece[r+1]]  (50% overlap) --
    # The trailing zero piece per chunk reproduces the reference framing pad.
    p_cur = pieces_ref[:, pl.ds(0, t), :].reshape(m, hop)      # (m, HOP) bf16
    p_nxt = pieces_ref[:, pl.ds(1, t), :].reshape(m, hop)      # (m, HOP) bf16
    frames = jnp.concatenate([p_cur, p_nxt], axis=-1)          # (m, WIN) bf16

    # packed constant slab: static ref slices (zero cost views)
    dft_cat = wmats_ref[R_DFT:R_DFT + WIN, :]                  # (128, 128) bf16
    w1 = wmats_ref[R_W1:R_W1 + N_MELS, :]                      # (64, 128)  bf16
    w2 = wmats_ref[R_W2:R_W2 + HIDDEN, :]                      # (128, 128) bf16
    w3 = wmats_ref[R_W3:R_W3 + HIDDEN, :]                      # (128, 128) bf16
    b1 = biases_ref[0:1, :]
    b2 = biases_ref[1:2, :]
    b3 = biases_ref[2:3, :]

    # ---- SEDTransform: Hann-windowed real DFT, re|im fused on the lane axis --
    # single K=128 MXU push (previously two K=64 pushes)
    reim = jnp.dot(frames, dft_cat, preferred_element_type=jnp.float32)
    if bf16_square:                       # v6e/v7x: bf16 VALU square
        rb = reim.astype(jnp.bfloat16)
        sq = rb * rb                                            # (m, 128) bf16
    else:                                 # v5e: f32 square, single downcast
        sq = (reim * reim).astype(jnp.bfloat16)
    # power = sq[:, :N_BINS] + sq[:, N_BINS:] folded into the stacked mel FB
    mel = jnp.dot(sq, mel_fb_ref[...], preferred_element_type=jnp.float32)

    # ---- take_log: AmplitudeToDB(stype='amplitude', amin=1e-5), clamp[-50,80]
    db = 20.0 * jnp.log10(jnp.maximum(mel, 1e-5))
    db = jnp.clip(db, -50.0, 80.0)

    # ---- TorchScaler('instance','minmax'): per-chunk min/max normalization ---
    db3 = db.reshape(cb, t, N_MELS)
    mn = jnp.min(jnp.min(db3, axis=2, keepdims=True), axis=1, keepdims=True)
    mx = jnp.max(jnp.max(db3, axis=2, keepdims=True), axis=1, keepdims=True)
    feats3 = (db3 - mn) / (mx - mn + 1e-8)
    feats_ref[...] = feats3.astype(feats_ref.dtype)            # bf16 store

    # ---- per-frame MLP classifier head (CRNN stand-in); raw logits out -------
    f2 = feats3.reshape(m, N_MELS).astype(jnp.bfloat16)
    h1 = jnp.maximum(
        jnp.dot(f2, w1, preferred_element_type=jnp.float32) + b1, 0.0)
    h2 = jnp.tanh(
        jnp.dot(h1.astype(jnp.bfloat16), w2,
                preferred_element_type=jnp.float32) + b2)
    logits = (jnp.dot(h2.astype(jnp.bfloat16), w3,
                      preferred_element_type=jnp.float32) + b3)
    # lane-dense 128-wide bf16 store of raw logits; sigmoid + class slice in
    # the wrapper (padded lanes are zero weights/biases -> zero logits)
    strong_ref[...] = logits.astype(jnp.bfloat16).reshape(cb, t, N_CLASSES_PAD)


def run_sed_chunks(pieces, wmats, mel_fb, biases, *, chunk_block, bf16_square):
    """pieces: (n_pad, T_FRAMES+1, HOP) bf16 -> (feats bf16, strong logits bf16)."""
    n_pad, tp1, hop = pieces.shape
    t = tp1 - 1
    grid = (n_pad // chunk_block,)

    def const_spec(a):
        nd = a.ndim
        return pl.BlockSpec(a.shape, lambda i, _nd=nd: (0,) * _nd)

    consts = (wmats, mel_fb, biases)

    # advisory cost estimate so XLA schedules the custom call sensibly
    m_total = n_pad * t
    flops = 2 * m_total * (WIN * (2 * N_BINS)
                           + (2 * N_BINS) * N_MELS
                           + N_MELS * HIDDEN
                           + HIDDEN * HIDDEN
                           + HIDDEN * N_CLASSES_PAD)
    transc = m_total * (N_MELS + HIDDEN)          # log10 + tanh
    nbytes = int(pieces.size) * pieces.dtype.itemsize
    nbytes += sum(int(c.size) * c.dtype.itemsize for c in consts)
    nbytes += m_total * (N_MELS + N_CLASSES_PAD) * 2   # bf16 outputs

    kernel = functools.partial(_atst_sed_block_kernel, bf16_square=bf16_square)

    feats, strong = pl.pallas_call(
        kernel,
        out_shape=(
            jax.ShapeDtypeStruct((n_pad, t, N_MELS), jnp.bfloat16),
            jax.ShapeDtypeStruct((n_pad, t, N_CLASSES_PAD), jnp.bfloat16),
        ),
        grid_spec=pltpu.PrefetchScalarGridSpec(
            num_scalar_prefetch=0,
            grid=grid,
            in_specs=[pl.BlockSpec((chunk_block, tp1, hop),
                                   lambda i: (i, 0, 0))]
                     + [const_spec(c) for c in consts],
            out_specs=[
                pl.BlockSpec((chunk_block, t, N_MELS), lambda i: (i, 0, 0)),
                pl.BlockSpec((chunk_block, t, N_CLASSES_PAD),
                             lambda i: (i, 0, 0)),
            ],
        ),
        compiler_params=pltpu.CompilerParams(
            dimension_semantics=("parallel",)),
        cost_estimate=pl.CostEstimate(flops=flops, transcendentals=transc,
                                      bytes_accessed=nbytes),
    )(pieces, *consts)
    return feats, strong


# ------------------------------- glue (JAX) ----------------------------------
def chunk_audio(mixture):
    """nn.Unfold(kernel=(fs*audio_dur,1), stride=(fs*overlap_dur,1)) equivalent."""
    n = int(mixture.shape[0])
    if n // FS <= AUDIO_DUR:
        # TODO(synk): PyTorch short-audio path keeps the raw (unpadded) chunk;
        # here we pad it to CHUNK_LEN for a fixed kernel shape.
        total_length = CHUNK_LEN
        total_chunks = 1
    else:
        total_chunks = (n - (AUDIO_DUR - OVERLAP_DUR) * FS) // (OVERLAP_DUR * FS) + 1
        total_length = total_chunks * STRIDE + (AUDIO_DUR - OVERLAP_DUR) * FS
    pad = total_length - n
    mixture_pad = jnp.pad(mixture, (0, pad))
    chunks = jnp.stack(
        [mixture_pad[i * STRIDE: i * STRIDE + CHUNK_LEN]
         for i in range(total_chunks)], axis=0)
    return chunks, time2frame(pad), time2frame(total_length)


def make_pieces(chunks):
    """(n_chunks, CHUNK_LEN) -> (n_chunks, T_FRAMES + 1, HOP) bf16 pieces.

    frame[t] = chunk[t*HOP : t*HOP + WIN] = [piece[t] | piece[t+1]]; the extra
    trailing zero piece reproduces the (T-1)*HOP + WIN framing pad of the
    reference. The 2x-overlapping frame tensor is never materialized in HBM —
    the overlap is rebuilt in VMEM inside the kernel. bf16 here is numerically
    identical to the previous flow (the kernel already downcast before the MXU)
    but halves input DMA bytes.
    """
    n = chunks.shape[0]
    cp = jnp.pad(chunks, ((0, 0), (0, HOP)))
    return cp.reshape(n, T_FRAMES + 1, HOP).astype(jnp.bfloat16)


def choose_chunk_block(n_chunks, multi_tc):
    """Generation-aware blocking: on single-TC chips (v5e/v6e) the grid is a
    serial loop, so use one big block; on multi-TC chips (v7x) keep >=2
    parallel blocks so the grid axis shards across cores. cb is VMEM-capped."""
    cap = 32  # ~0.2 MiB live per chunk -> well within default scoped VMEM
    if n_chunks <= 1:
        return 1
    if multi_tc:
        cb = min(cap, max(1, (n_chunks + 1) // 2))
        while cb > 1 and (n_chunks + cb - 1) // cb < 2:
            cb //= 2
        return cb
    return min(cap, n_chunks)


def median_filter_time(x, size):
    """scipy.ndimage.median_filter along the last axis (odd size, 'reflect')."""
    r = size // 2
    pad = [(0, 0)] * (x.ndim - 1) + [(r, r)]
    xp = jnp.pad(x, pad, mode="symmetric")
    tlen = x.shape[-1]
    win = jnp.stack([xp[..., i:i + tlen] for i in range(size)], axis=0)
    return jnp.median(win, axis=0)


def post_process_batched(strong_ct):
    """(n_chunks, C, T) sigmoid scores -> (n_chunks, C, T) boolean decisions."""
    if len(set(MEDIAN_WINDOW)) == 1:
        smoothed = median_filter_time(strong_ct, MEDIAN_WINDOW[0])
    else:
        smoothed = jnp.stack(
            [median_filter_time(strong_ct[:, c, :], MEDIAN_WINDOW[c])
             for c in range(N_CLASSES)], axis=1)
    th = jnp.asarray(HARD_THRESHOLD, dtype=jnp.float32)[None, :, None]
    return smoothed > th


def decision_unify(chunk_decisions, total_frames, padding_frames):
    n, c, t = chunk_decisions.shape
    if n == 1:
        return chunk_decisions[0].astype(jnp.float32)
    hop_frame = time2frame(OVERLAP_DUR * FS)
    dec = jnp.zeros((c, total_frames), dtype=jnp.float32)
    for i in range(n):
        dec = dec.at[:, i * hop_frame: i * hop_frame + t].add(
            chunk_decisions[i].astype(jnp.float32))
    out = (dec > 0).astype(jnp.float32)
    if padding_frames > 0:
        out = out[:, :-padding_frames]
    return out


# --------------------------- deterministic params ----------------------------
def build_params():
    # Hann-windowed real-DFT analysis matrix with real|imag fused on the output
    # (lane) axis; frames are rebuilt from two consecutive HOP-sample pieces
    # lane-concatenated inside the kernel, so the full (WIN, 2*N_BINS) matrix
    # is used in one K=128 matmul.
    n = np.arange(WIN, dtype=np.float64)[:, None]
    k = np.arange(N_BINS, dtype=np.float64)[None, :]
    hann = 0.5 - 0.5 * np.cos(2.0 * np.pi * np.arange(WIN) / WIN)
    ang = 2.0 * np.pi * n * k / WIN
    dft_r = hann[:, None] * np.cos(ang)
    dft_i = hann[:, None] * -np.sin(ang)
    dft_cat = np.concatenate([dft_r, dft_i], axis=1).astype(np.float32)  # (128, 128)

    # Triangular "mel" filterbank stacked twice so power = re^2 + im^2 is
    # folded into the same matmul ( mel = [re^2 | im^2] @ [fb; fb] ).
    f = np.arange(N_BINS, dtype=np.float64)[:, None]
    m = np.arange(N_MELS, dtype=np.float64)[None, :]
    mel_fb = np.maximum(0.0, 1.0 - np.abs(f - m) / 2.0).astype(np.float32)
    mel_fb2 = np.concatenate([mel_fb, mel_fb], axis=0)                   # (128, 64)

    key = jax.random.PRNGKey(0)
    k1, k2, k3, k4, k5, k6 = jax.random.split(key, 6)
    w1 = jax.random.normal(k1, (N_MELS, HIDDEN), jnp.float32) / np.sqrt(N_MELS)
    b1 = 0.01 * jax.random.normal(k2, (1, HIDDEN), jnp.float32)
    w2 = jax.random.normal(k3, (HIDDEN, HIDDEN), jnp.float32) / np.sqrt(HIDDEN)
    b2 = 0.01 * jax.random.normal(k4, (1, HIDDEN), jnp.float32)
    w3 = jax.random.normal(k5, (HIDDEN, N_CLASSES), jnp.float32) / np.sqrt(HIDDEN)
    b3 = 0.01 * jax.random.normal(k6, (1, N_CLASSES), jnp.float32)
    # zero-pad classifier output to a lane-dense 128-wide store
    w3p = jnp.zeros((HIDDEN, N_CLASSES_PAD), jnp.float32).at[:, :N_CLASSES].set(w3)
    b3p = jnp.zeros((1, N_CLASSES_PAD), jnp.float32).at[:, :N_CLASSES].set(b3)

    # pack the bf16 matmul operands into one (WMAT_ROWS, 128) slab and the
    # three biases into one (3, 128) f32 slab -> 3 constant DMA descriptors
    wmats = jnp.concatenate(
        [jnp.asarray(dft_cat), w1, w2, w3p], axis=0).astype(jnp.bfloat16)
    assert wmats.shape == (WMAT_ROWS, HIDDEN)
    mel_fb_bf = jnp.asarray(mel_fb2, jnp.bfloat16)
    biases = jnp.concatenate([b1, b2, b3p], axis=0).astype(jnp.float32)  # (3, 128)
    return wmats, mel_fb_bf, biases


# ---------------------------------- main --------------------------------------
@functools.partial(
    jax.jit,
    static_argnames=("n_chunks", "chunk_block", "total_frames",
                     "padding_frames", "bf16_square"))
def _forward_core(pieces, params, *, n_chunks, chunk_block, total_frames,
                  padding_frames, bf16_square):
    feats_pad, strong_pad = run_sed_chunks(pieces, *params,
                                           chunk_block=chunk_block,
                                           bf16_square=bf16_square)
    feats = feats_pad[:n_chunks].astype(jnp.float32)
    # kernel emits raw logits; sigmoid + class slice here (sigmoid(x)>0.5 == x>0)
    logits_ct = jnp.transpose(
        strong_pad[:n_chunks, :, :N_CLASSES].astype(jnp.float32), (0, 2, 1))
    strong_ct = jax.nn.sigmoid(logits_ct)          # (chunk, classes, frames)
    chunk_decisions = post_process_batched(strong_ct)
    decisions = decision_unify(chunk_decisions, total_frames, padding_frames)
    return feats, strong_ct, decisions


def atst_sed_inferencer_forward(mixture, params):
    multi_tc, bf16_vpu = _detect_tpu()
    chunks, padding_frames, total_frames = chunk_audio(mixture)
    pieces = make_pieces(chunks)                        # (n_chunks, T+1, HOP) bf16
    n_chunks = pieces.shape[0]
    cb = choose_chunk_block(n_chunks, multi_tc)
    n_pad = ((n_chunks + cb - 1) // cb) * cb
    if n_pad > n_chunks:                                # pad with silent chunks
        pieces = jnp.pad(pieces, ((0, n_pad - n_chunks), (0, 0), (0, 0)))
    return _forward_core(pieces, params, n_chunks=n_chunks, chunk_block=cb,
                         total_frames=total_frames,
                         padding_frames=padding_frames,
                         bf16_square=bf16_vpu)


if __name__ == "__main__":
    params = build_params()
    # 16 seconds of synthetic audio at FS=256 -> 4 overlapping 10 s chunks
    key = jax.random.PRNGKey(0)
    mixture = jax.random.normal(key, (16 * FS,), dtype=jnp.float32)

    feats, strong, decisions = atst_sed_inferencer_forward(mixture, params)
    jax.block_until_ready(decisions)

    assert feats.shape == (4, T_FRAMES, N_MELS)
    assert strong.shape == (4, N_CLASSES, T_FRAMES)
    assert decisions.shape[0] == N_CLASSES
    print("KERNEL_OK")
</pallas_src>

<mosaic_0001>
module attributes {stable_mosaic.version = 11 : i64} {
  func.func @_atst_sed_block_kernel(%arg0: i32, %arg1: memref<4x41x64xbf16, #tpu.memory_space<vmem>>, %arg2: memref<448x128xbf16, #tpu.memory_space<vmem>>, %arg3: memref<128x64xbf16, #tpu.memory_space<vmem>>, %arg4: memref<3x128xf32, #tpu.memory_space<vmem>>, %arg5: memref<4x40x64xbf16, #tpu.memory_space<vmem>>, %arg6: memref<4x40x128xbf16, #tpu.memory_space<vmem>>) attributes {dimension_semantics = [#tpu.dimension_semantics<parallel>], iteration_bounds = array<i64: 1>, scalar_prefetch = 0 : i64, scratch_operands = 0 : i64, tpu.core_type = #tpu.core_type<tc>, window_params = [{transform_indices = @transform_0, window_bounds = array<i64: 4, 41, 64>}, {pipeline_mode = #tpu.pipeline_mode<synchronous>, transform_indices = @transform_1, window_bounds = array<i64: 448, 128>}, {pipeline_mode = #tpu.pipeline_mode<synchronous>, transform_indices = @transform_2, window_bounds = array<i64: 128, 64>}, {pipeline_mode = #tpu.pipeline_mode<synchronous>, transform_indices = @transform_3, window_bounds = array<i64: 3, 128>}, {transform_indices = @transform_4, window_bounds = array<i64: 4, 40, 64>}, {transform_indices = @transform_5, window_bounds = array<i64: 4, 40, 128>}]} {
    %c0 = arith.constant 0 : index
    %c0_0 = arith.constant 0 : index
    %c0_1 = arith.constant 0 : index
    %0 = vector.load %arg1[%c0, %c0_0, %c0_1] : memref<4x41x64xbf16, #tpu.memory_space<vmem>>, vector<4x40x64xbf16>
    %1 = vector.shape_cast %0 : vector<4x40x64xbf16> to vector<160x64xbf16>
    %c0_2 = arith.constant 0 : index
    %c1 = arith.constant 1 : index
    %c0_3 = arith.constant 0 : index
    %2 = vector.load %arg1[%c0_2, %c1, %c0_3] : memref<4x41x64xbf16, #tpu.memory_space<vmem>>, vector<4x40x64xbf16>
    %3 = vector.shape_cast %2 : vector<4x40x64xbf16> to vector<160x64xbf16>
    %4 = tpu.concatenate %1, %3 in 1 : vector<160x64xbf16>, vector<160x64xbf16> -> vector<160x128xbf16>
    %c0_4 = arith.constant 0 : index
    %c0_5 = arith.constant 0 : index
    %5 = vector.load %arg2[%c0_4, %c0_5] : memref<448x128xbf16, #tpu.memory_space<vmem>>, vector<128x128xbf16>
    %c128 = arith.constant 128 : index
    %c0_6 = arith.constant 0 : index
    %6 = vector.load %arg2[%c128, %c0_6] : memref<448x128xbf16, #tpu.memory_space<vmem>>, vector<64x128xbf16>
    %c192 = arith.constant 192 : index
    %c0_7 = arith.constant 0 : index
    %7 = vector.load %arg2[%c192, %c0_7] : memref<448x128xbf16, #tpu.memory_space<vmem>>, vector<128x128xbf16>
    %c320 = arith.constant 320 : index
    %c0_8 = arith.constant 0 : index
    %8 = vector.load %arg2[%c320, %c0_8] : memref<448x128xbf16, #tpu.memory_space<vmem>>, vector<128x128xbf16>
    %c0_9 = arith.constant 0 : index
    %c0_10 = arith.constant 0 : index
    %9 = vector.load %arg4[%c0_9, %c0_10] : memref<3x128xf32, #tpu.memory_space<vmem>>, vector<1x128xf32>
    %c1_11 = arith.constant 1 : index
    %c0_12 = arith.constant 0 : index
    %10 = vector.load %arg4[%c1_11, %c0_12] : memref<3x128xf32, #tpu.memory_space<vmem>>, vector<1x128xf32>
    %c2 = arith.constant 2 : index
    %c0_13 = arith.constant 0 : index
    %11 = vector.load %arg4[%c2, %c0_13] : memref<3x128xf32, #tpu.memory_space<vmem>>, vector<1x128xf32>
    %cst = arith.constant dense<0.000000e+00> : vector<160x128xf32>
    %12 = tpu.matmul %4, %5, %cst {dimension_numbers = #tpu.dot_dimension_numbers<[1], [0], [0], [1], [0, 0, 1, 1], [], []>} : vector<160x128xbf16>, vector<128x128xbf16>, vector<160x128xf32> -> vector<160x128xf32>
    %13 = arith.mulf %12, %12 : vector<160x128xf32>
    %14 = arith.truncf %13 : vector<160x128xf32> to vector<160x128xbf16>
    %c0_14 = arith.constant 0 : index
    %c0_15 = arith.constant 0 : index
    %15 = vector.load %arg3[%c0_14, %c0_15] : memref<128x64xbf16, #tpu.memory_space<vmem>>, vector<128x64xbf16>
    %cst_16 = arith.constant dense<0.000000e+00> : vector<160x64xf32>
    %16 = tpu.matmul %14, %15, %cst_16 {dimension_numbers = #tpu.dot_dimension_numbers<[1], [0], [0], [1], [0, 0, 1, 1], [], []>} : vector<160x128xbf16>, vector<128x64xbf16>, vector<160x64xf32> -> vector<160x64xf32>
    %cst_17 = arith.constant 9.99999974E-6 : f32
    %17 = vector.broadcast %cst_17 : f32 to vector<160x64xf32>
    %18 = arith.maximumf %16, %17 : vector<160x64xf32>
    %19 = math.log %18 : vector<160x64xf32>
    %cst_18 = arith.constant 0.434294492 : f32
    %20 = vector.broadcast %cst_18 : f32 to vector<160x64xf32>
    %21 = arith.mulf %19, %20 : vector<160x64xf32>
    %cst_19 = arith.constant 2.000000e+01 : f32
    %22 = vector.broadcast %cst_19 : f32 to vector<160x64xf32>
    %23 = arith.mulf %22, %21 : vector<160x64xf32>
    %cst_20 = arith.constant -5.000000e+01 : f32
    %cst_21 = arith.constant 8.000000e+01 : f32
    %24 = vector.broadcast %cst_20 : f32 to vector<160x64xf32>
    %25 = arith.maximumf %24, %23 : vector<160x64xf32>
    %26 = vector.broadcast %cst_21 : f32 to vector<160x64xf32>
    %27 = arith.minimumf %26, %25 : vector<160x64xf32>
    %28 = vector.shape_cast %27 : vector<160x64xf32> to vector<4x40x64xf32>
    %cst_22 = arith.constant dense<0x7F800000> : vector<4x40xf32>
    %29 = vector.multi_reduction <minimumf>, %28, %cst_22 [2] : vector<4x40x64xf32> to vector<4x40xf32>
    %30 = vector.shape_cast %29 : vector<4x40xf32> to vector<4x40x1xf32>
    %cst_23 = arith.constant dense<0x7F800000> : vector<4x1xf32>
    %31 = vector.multi_reduction <minimumf>, %30, %cst_23 [1] : vector<4x40x1xf32> to vector<4x1xf32>
    %32 = vector.shape_cast %31 : vector<4x1xf32> to vector<4x1x1xf32>
    %cst_24 = arith.constant dense<0xFF800000> : vector<4x40xf32>
    %33 = vector.multi_reduction <maximumf>, %28, %cst_24 [2] : vector<4x40x64xf32> to vector<4x40xf32>
    %34 = vector.shape_cast %33 : vector<4x40xf32> to vector<4x40x1xf32>
    %cst_25 = arith.constant dense<0xFF800000> : vector<4x1xf32>
    %35 = vector.multi_reduction <maximumf>, %34, %cst_25 [1] : vector<4x40x1xf32> to vector<4x1xf32>
    %36 = vector.shape_cast %35 : vector<4x1xf32> to vector<4x1x1xf32>
    %37 = vector.broadcast %32 : vector<4x1x1xf32> to vector<4x40x64xf32>
    %38 = arith.subf %28, %37 : vector<4x40x64xf32>
    %39 = arith.subf %36, %32 : vector<4x1x1xf32>
    %cst_26 = arith.constant 9.99999993E-9 : f32
    %40 = vector.broadcast %cst_26 : f32 to vector<4x1x1xf32>
    %41 = arith.addf %39, %40 : vector<4x1x1xf32>
    %42 = vector.broadcast %41 : vector<4x1x1xf32> to vector<4x40x64xf32>
    %43 = arith.divf %38, %42 : vector<4x40x64xf32>
    %44 = arith.truncf %43 : vector<4x40x64xf32> to vector<4x40x64xbf16>
    %c0_27 = arith.constant 0 : index
    %c0_28 = arith.constant 0 : index
    %c0_29 = arith.constant 0 : index
    %45 = vector.load %arg5[%c0_27, %c0_28, %c0_29] : memref<4x40x64xbf16, #tpu.memory_space<vmem>>, vector<4x40x64xbf16>
    tpu.vector_store %arg5[%c0_27, %c0_28, %c0_29], %44 {strides = array<i32>} : memref<4x40x64xbf16, #tpu.memory_space<vmem>>, vector<4x40x64xbf16>,
    %46 = vector.shape_cast %43 : vector<4x40x64xf32> to vector<160x64xf32>
    %47 = arith.truncf %46 : vector<160x64xf32> to vector<160x64xbf16>
    %cst_30 = arith.constant dense<0.000000e+00> : vector<160x128xf32>
    %48 = tpu.matmul %47, %6, %cst_30 {dimension_numbers = #tpu.dot_dimension_numbers<[1], [0], [0], [1], [0, 0, 1, 1], [], []>} : vector<160x64xbf16>, vector<64x128xbf16>, vector<160x128xf32> -> vector<160x128xf32>
    %49 = vector.broadcast %9 : vector<1x128xf32> to vector<160x128xf32>
    %50 = arith.addf %48, %49 : vector<160x128xf32>
    %cst_31 = arith.constant 0.000000e+00 : f32
    %51 = vector.broadcast %cst_31 : f32 to vector<160x128xf32>
    %52 = arith.maximumf %50, %51 : vector<160x128xf32>
    %53 = arith.truncf %52 : vector<160x128xf32> to vector<160x128xbf16>
    %cst_32 = arith.constant dense<0.000000e+00> : vector<160x128xf32>
    %54 = tpu.matmul %53, %7, %cst_32 {dimension_numbers = #tpu.dot_dimension_numbers<[1], [0], [0], [1], [0, 0, 1, 1], [], []>} : vector<160x128xbf16>, vector<128x128xbf16>, vector<160x128xf32> -> vector<160x128xf32>
    %55 = vector.broadcast %10 : vector<1x128xf32> to vector<160x128xf32>
    %56 = arith.addf %54, %55 : vector<160x128xf32>
    %57 = math.tanh %56 : vector<160x128xf32>
    %58 = arith.truncf %57 : vector<160x128xf32> to vector<160x128xbf16>
    %cst_33 = arith.constant dense<0.000000e+00> : vector<160x128xf32>
    %59 = tpu.matmul %58, %8, %cst_33 {dimension_numbers = #tpu.dot_dimension_numbers<[1], [0], [0], [1], [0, 0, 1, 1], [], []>} : vector<160x128xbf16>, vector<128x128xbf16>, vector<160x128xf32> -> vector<160x128xf32>
    %60 = vector.broadcast %11 : vector<1x128xf32> to vector<160x128xf32>
    %61 = arith.addf %59, %60 : vector<160x128xf32>
    %62 = arith.truncf %61 : vector<160x128xf32> to vector<160x128xbf16>
    %63 = vector.shape_cast %62 : vector<160x128xbf16> to vector<4x40x128xbf16>
    %c0_34 = arith.constant 0 : index
    %c0_35 = arith.constant 0 : index
    %c0_36 = arith.constant 0 : index
    %64 = vector.load %arg6[%c0_34, %c0_35, %c0_36] : memref<4x40x128xbf16, #tpu.memory_space<vmem>>, vector<4x40x128xbf16>
    tpu.vector_store %arg6[%c0_34, %c0_35, %c0_36], %63 {strides = array<i32>} : memref<4x40x128xbf16, #tpu.memory_space<vmem>>, vector<4x40x128xbf16>,
    return
  }
  func.func @transform_0(%arg0: i32) -> (i32, i32, i32) {
    %c0_i32 = arith.constant 0 : i32
    %c0_i32_0 = arith.constant 0 : i32
    %c0_i32_1 = arith.constant 0 : i32
    return %arg0, %c0_i32, %c0_i32_0 : i32, i32, i32
  }
  func.func @transform_1(%arg0: i32) -> (i32, i32) {
    %c0_i32 = arith.constant 0 : i32
    %c0_i32_0 = arith.constant 0 : i32
    %c0_i32_1 = arith.constant 0 : i32
    return %c0_i32, %c0_i32_0 : i32, i32
  }
  func.func @transform_2(%arg0: i32) -> (i32, i32) {
    %c0_i32 = arith.constant 0 : i32
    %c0_i32_0 = arith.constant 0 : i32
    %c0_i32_1 = arith.constant 0 : i32
    return %c0_i32, %c0_i32_0 : i32, i32
  }
  func.func @transform_3(%arg0: i32) -> (i32, i32) {
    %c0_i32 = arith.constant 0 : i32
    %c0_i32_0 = arith.constant 0 : i32
    %c0_i32_1 = arith.constant 0 : i32
    return %c0_i32, %c0_i32_0 : i32, i32
  }
  func.func @transform_4(%arg0: i32) -> (i32, i32, i32) {
    %c0_i32 = arith.constant 0 : i32
    %c0_i32_0 = arith.constant 0 : i32
    %c0_i32_1 = arith.constant 0 : i32
    return %arg0, %c0_i32, %c0_i32_0 : i32, i32, i32
  }
  func.func @transform_5(%arg0: i32) -> (i32, i32, i32) {
    %c0_i32 = arith.constant 0 : i32
    %c0_i32_0 = arith.constant 0 : i32
    %c0_i32_1 = arith.constant 0 : i32
    return %arg0, %c0_i32, %c0_i32_0 : i32, i32, i32
  }
}

</mosaic_0001>

<llo_original>
// kernel: _forward_core.1
$region0: #{_forward_core.1}
  #allocation0 [shape = 'u32[]', space=smem, size = 0x4, offset = 0x4, fixed_abs, tag = 'smem constant byte address 0x4 - core index']
  #allocation1 [shape = 'u32[72,128]{1,0:T(1,128)}', space=vmem, size = 0x9000, scoped, tag = 'internal scratch']
  %s0 = inlined_call_operand.vmem [shape: bf16[4,41,64], index: 0, kind: input, shape index: {}]
  %s1 = inlined_call_operand.vmem [shape: bf16[448,128], index: 1, kind: input, shape index: {}]
  %s2 = inlined_call_operand.vmem [shape: bf16[128,64], index: 2, kind: input, shape index: {}]
  %s3 = inlined_call_operand.vmem [shape: f32[3,128], index: 3, kind: input, shape index: {}]
  %s4 = inlined_call_operand.vmem [shape: bf16[4,40,64], index: 4, kind: output, shape index: {0}]
  %s5 = inlined_call_operand.vmem [shape: bf16[4,40,128], index: 5, kind: output, shape index: {1}]
  %6 = xla_tuple %s4, %s5
  %s7 = sld [smem:[#allocation0]]
  $region34: #{_forward_core.1} parent=0
    _
  %s9 = ssub.s32 1, %s7
  %s10 = scalar_select 0, %s9, %s7
  // Predicated region
  $region2: #{_forward_core.1} parent=0 // pred_check
    _
  $region3: #{_forward_core.1} parent=0 // pred_check_branch
    %12 = sbr.rel (0) target = $region5
  $region4: #{_forward_core.1} parent=0 // pred_region
    _
  $region5: #{_forward_core.1} parent=0 // pred_fallthru
    _
  // Predicated region
  $region6: #{_forward_core.1} parent=0 // pred_check
    _
  $region7: #{_forward_core.1} parent=0 // pred_check_branch
    %14 = sbr.rel (0) target = $region9
  $region8: #{_forward_core.1} parent=0 // pred_region
    _
  $region9: #{_forward_core.1} parent=0 // pred_fallthru
    _
  // Predicated region
  $region10: #{_forward_core.1} parent=0 // pred_check
    _
  $region11: #{_forward_core.1} parent=0 // pred_check_branch
    %16 = sbr.rel (0) target = $region13
  $region12: #{_forward_core.1} parent=0 // pred_region
    _
  $region13: #{_forward_core.1} parent=0 // pred_fallthru
    _
  // Predicated region
  $region14: #{_forward_core.1} parent=0 // pred_check
    _
  $region15: #{_forward_core.1} parent=0 // pred_check_branch
    %18 = sbr.rel (0) target = $region17
  $region16: #{_forward_core.1} parent=0 // pred_region
    _
  $region17: #{_forward_core.1} parent=0 // pred_fallthru
    _
  %v20 = vld [vmem:[%s0] sm:$0xf]
  %v21 = vld [vmem:[%s0 + $0x4] sm:$0xf]
  %v22 = vld [vmem:[%s0 + $0x8] sm:$0xf]
  %v23 = vld [vmem:[%s0 + $0xc] sm:$0xf]
  %v24 = vld [vmem:[%s0 + $0x10] sm:$0xf]
  %v25 = vld [vmem:[%s0 + $0x18] sm:$0xf]
  %v26 = vld [vmem:[%s0 + $0x1c] sm:$0xf]
  %v27 = vld [vmem:[%s0 + $0x20] sm:$0xf]
  %v28 = vld [vmem:[%s0 + $0x24] sm:$0xf]
  %v29 = vld [vmem:[%s0 + $0x28] sm:$0xf]
  %v30 = vld [vmem:[%s0 + $0x30] sm:$0xf]
  %v31 = vld [vmem:[%s0 + $0x34] sm:$0xf]
  %v32 = vld [vmem:[%s0 + $0x38] sm:$0xf]
  %v33 = vld [vmem:[%s0 + $0x3c] sm:$0xf]
  %v34 = vld [vmem:[%s0 + $0x40] sm:$0xf]
  %v35 = vld [vmem:[%s0 + $0x48] sm:$0xf]
  %v36 = vld [vmem:[%s0 + $0x4c] sm:$0xf]
  %v37 = vld [vmem:[%s0 + $0x50] sm:$0xf]
  %v38 = vld [vmem:[%s0 + $0x54] sm:$0xf]
  %v39 = vld [vmem:[%s0 + $0x58] sm:$0xf]
  %v40 = vld [vmem:[%s0 + $0x14] sm:$0x1]
  %v41 = vld [vmem:[%s0 + $0x2c] sm:$0x1]
  %v42 = vld [vmem:[%s0 + $0x44] sm:$0x1]
  %v43 = vld [vmem:[%s0 + $0x5c] sm:$0x1]
  %vm44 = vsmask.f32 3328
  %vm45 = vsmask.f32 7440
  %vm46 = vmor %vm44, %vm45
  %v48 = vshrl.u32 %v20, 16
  %v50 = vrot.slane %v48, 4
  %v51 = vshll.u32 %v20, 16
  %v53 = vrot.slane %v51, 5
  %v54 = vor.u32 %v50, %v53
  %v55 = vrot.slane %v54, 4
  %v57 = vshll.u32 %v21, 16
  %v59 = vrot.slane %v57, 5
  %v60 = vsel %vm46, %v55, %v59
  %v61 = vshrl.u32 %v21, 16
  %v63 = vrot.slane %v61, 4
  %v64 = vor.u32 %v63, %v59
  %v65 = vrot.slane %v64, 4
  %v67 = vshll.u32 %v22, 16
  %v69 = vrot.slane %v67, 5
  %v70 = vsel %vm46, %v65, %v69
  %v71 = vshrl.u32 %v22, 16
  %v73 = vrot.slane %v71, 4
  %v74 = vor.u32 %v73, %v69
  %v75 = vrot.slane %v74, 4
  %v77 = vshll.u32 %v23, 16
  %v79 = vrot.slane %v77, 5
  %v80 = vsel %vm46, %v75, %v79
  %v81 = vshrl.u32 %v23, 16
  %v83 = vrot.slane %v81, 4
  %v84 = vor.u32 %v83, %v79
  %v85 = vrot.slane %v84, 4
  %v87 = vshll.u32 %v24, 16
  %v89 = vrot.slane %v87, 5
  %v90 = vsel %vm46, %v85, %v89
  %v91 = vshrl.u32 %v24, 16
  %v93 = vrot.slane %v91, 4
  %v94 = vor.u32 %v93, %v89
  %v95 = vrot.slane %v94, 4
  %v97 = vshll.u32 %v40, 16
  %v99 = vrot.slane %v97, 5
  %v100 = vsel %vm46, %v95, %v99
  %v102 = vshrl.u32 %v25, 16
  %v104 = vrot.slane %v102, 4
  %v105 = vshll.u32 %v25, 16
  %v107 = vrot.slane %v105, 5
  %v108 = vor.u32 %v104, %v107
  %v109 = vrot.slane %v108, 4
  %v111 = vshll.u32 %v26, 16
  %v113 = vrot.slane %v111, 5
  %v114 = vsel %vm46, %v109, %v113
  %v115 = vshrl.u32 %v26, 16
  %v117 = vrot.slane %v115, 4
  %v118 = vor.u32 %v117, %v113
  %v119 = vrot.slane %v118, 4
  %v121 = vshll.u32 %v27, 16
  %v123 = vrot.slane %v121, 5
  %v124 = vsel %vm46, %v119, %v123
  %v125 = vshrl.u32 %v27, 16
  %v127 = vrot.slane %v125, 4
  %v128 = vor.u32 %v127, %v123
  %v129 = vrot.slane %v128, 4
  %v131 = vshll.u32 %v28, 16
  %v133 = vrot.slane %v131, 5
  %v134 = vsel %vm46, %v129, %v133
  %v135 = vshrl.u32 %v28, 16
  %v137 = vrot.slane %v135, 4
  %v138 = vor.u32 %v137, %v133
  %v139 = vrot.slane %v138, 4
  %v141 = vshll.u32 %v29, 16
  %v143 = vrot.slane %v141, 5
  %v144 = vsel %vm46, %v139, %v143
  %v145 = vshrl.u32 %v29, 16
  %v147 = vrot.slane %v145, 4
  %v148 = vor.u32 %v147, %v143
  %v149 = vrot.slane %v148, 4
  %v151 = vshll.u32 %v41, 16
  %v153 = vrot.slane %v151, 5
  %v154 = vsel %vm46, %v149, %v153
  %v156 = vshrl.u32 %v30, 16
  %v158 = vrot.slane %v156, 4
  %v159 = vshll.u32 %v30, 16
  %v161 = vrot.slane %v159, 5
  %v162 = vor.u32 %v158, %v161
  %v163 = vrot.slane %v162, 4
  %v165 = vshll.u32 %v31, 16
  %v167 = vrot.slane %v165, 5
  %v168 = vsel %vm46, %v163, %v167
  %v169 = vshrl.u32 %v31, 16
  %v171 = vrot.slane %v169, 4
  %v172 = vor.u32 %v171, %v167
  %v173 = vrot.slane %v172, 4
  %v175 = vshll.u32 %v32, 16
  %v177 = vrot.slane %v175, 5
  %v178 = vsel %vm46, %v173, %v177
  %v179 = vshrl.u32 %v32, 16
  %v181 = vrot.slane %v179, 4
  %v182 = vor.u32 %v181, %v177
  %v183 = vrot.slane %v182, 4
  %v185 = vshll.u32 %v33, 16
  %v187 = vrot.slane %v185, 5
  %v188 = vsel %vm46, %v183, %v187
  %v189 = vshrl.u32 %v33, 16
  %v191 = vrot.slane %v189, 4
  %v192 = vor.u32 %v191, %v187
  %v193 = vrot.slane %v192, 4
  %v195 = vshll.u32 %v34, 16
  %v197 = vrot.slane %v195, 5
  %v198 = vsel %vm46, %v193, %v197
  %v199 = vshrl.u32 %v34, 16
  %v201 = vrot.slane %v199, 4
  %v202 = vor.u32 %v201, %v197
  %v203 = vrot.slane %v202, 4
  %v205 = vshll.u32 %v42, 16
  %v207 = vrot.slane %v205, 5
  %v208 = vsel %vm46, %v203, %v207
  %v210 = vshrl.u32 %v35, 16
  %v212 = vrot.slane %v210, 4
  %v213 = vshll.u32 %v35, 16
  %v215 = vrot.slane %v213, 5
  %v216 = vor.u32 %v212, %v215
  %v217 = vrot.slane %v216, 4
  %v219 = vshll.u32 %v36, 16
  %v221 = vrot.slane %v219, 5
  %v222 = vsel %vm46, %v217, %v221
  %v223 = vshrl.u32 %v36, 16
  %v225 = vrot.slane %v223, 4
  %v226 = vor.u32 %v225, %v221
  %v227 = vrot.slane %v226, 4
  %v229 = vshll.u32 %v37, 16
  %v231 = vrot.slane %v229, 5
  %v232 = vsel %vm46, %v227, %v231
  %v233 = vshrl.u32 %v37, 16
  %v235 = vrot.slane %v233, 4
  %v236 = vor.u32 %v235, %v231
  %v237 = vrot.slane %v236, 4
  %v239 = vshll.u32 %v38, 16
  %v241 = vrot.slane %v239, 5
  %v242 = vsel %vm46, %v237, %v241
  %v243 = vshrl.u32 %v38, 16
  %v245 = vrot.slane %v243, 4
  %v246 = vor.u32 %v245, %v241
  %v247 = vrot.slane %v246, 4
  %v249 = vshll.u32 %v39, 16
  %v251 = vrot.slane %v249, 5
  %v252 = vsel %vm46, %v247, %v251
  %v253 = vshrl.u32 %v39, 16
  %v255 = vrot.slane %v253, 4
  %v256 = vor.u32 %v255, %v251
  %v257 = vrot.slane %v256, 4
  %v259 = vshll.u32 %v43, 16
  %v261 = vrot.slane %v259, 5
  %v262 = vsel %vm46, %v257, %v261
  %v283 = vunpack.c.l.b16 %v20
  %v284 = vunpack.c.l.b16 %v21
  %v285 = vunpack.c.l.b16 %v22
  %v286 = vunpack.c.l.b16 %v23
  %v287 = vunpack.c.l.b16 %v24
  %v288 = vunpack.c.l.b16 %v25
  %v289 = vunpack.c.l.b16 %v26
  %v290 = vunpack.c.l.b16 %v27
  %v291 = vunpack.c.l.b16 %v28
  %v292 = vunpack.c.l.b16 %v29
  %v293 = vunpack.c.l.b16 %v30
  %v294 = vunpack.c.l.b16 %v31
  %v295 = vunpack.c.l.b16 %v32
  %v296 = vunpack.c.l.b16 %v33
  %v297 = vunpack.c.l.b16 %v34
  %v298 = vunpack.c.l.b16 %v35
  %v299 = vunpack.c.l.b16 %v36
  %v300 = vunpack.c.l.b16 %v37
  %v301 = vunpack.c.l.b16 %v38
  %v302 = vunpack.c.l.b16 %v39
  %v303 = vpack.c.b16 %v284, %v283
  %v304 = vpack.c.b16 %v286, %v285
  %v305 = vpack.c.b16 %v288, %v287
  %v306 = vpack.c.b16 %v290, %v289
  %v307 = vpack.c.b16 %v292, %v291
  %v308 = vpack.c.b16 %v294, %v293
  %v309 = vpack.c.b16 %v296, %v295
  %v310 = vpack.c.b16 %v298, %v297
  %v311 = vpack.c.b16 %v300, %v299
  %v312 = vpack.c.b16 %v302, %v301
  %v313 = vunpack.c.l.b16 %v60
  %v314 = vunpack.c.l.b16 %v70
  %v315 = vunpack.c.l.b16 %v80
  %v316 = vunpack.c.l.b16 %v90
  %v317 = vunpack.c.l.b16 %v100
  %v318 = vunpack.c.l.b16 %v114
  %v319 = vunpack.c.l.b16 %v124
  %v320 = vunpack.c.l.b16 %v134
  %v321 = vunpack.c.l.b16 %v144
  %v322 = vunpack.c.l.b16 %v154
  %v323 = vunpack.c.l.b16 %v168
  %v324 = vunpack.c.l.b16 %v178
  %v325 = vunpack.c.l.b16 %v188
  %v326 = vunpack.c.l.b16 %v198
  %v327 = vunpack.c.l.b16 %v208
  %v328 = vunpack.c.l.b16 %v222
  %v329 = vunpack.c.l.b16 %v232
  %v330 = vunpack.c.l.b16 %v242
  %v331 = vunpack.c.l.b16 %v252
  %v332 = vunpack.c.l.b16 %v262
  %v333 = vpack.c.b16 %v314, %v313
  %v334 = vpack.c.b16 %v316, %v315
  %v335 = vpack.c.b16 %v318, %v317
  %v336 = vpack.c.b16 %v320, %v319
  %v337 = vpack.c.b16 %v322, %v321
  %v338 = vpack.c.b16 %v324, %v323
  %v339 = vpack.c.b16 %v326, %v325
  %v340 = vpack.c.b16 %v328, %v327
  %v341 = vpack.c.b16 %v330, %v329
  %v342 = vpack.c.b16 %v332, %v331
  %343 = vrot.lane.b32.xlu0 %v333, 64
  %v344 = vpop.permute.xlu0 %343
  %345 = vrot.lane.b32.xlu0 %v334, 64
  %v346 = vpop.permute.xlu0 %345
  %347 = vrot.lane.b32.xlu0 %v335, 64
  %v348 = vpop.permute.xlu0 %347
  %349 = vrot.lane.b32.xlu0 %v336, 64
  %v350 = vpop.permute.xlu0 %349
  %351 = vrot.lane.b32.xlu0 %v337, 64
  %v352 = vpop.permute.xlu0 %351
  %353 = vrot.lane.b32.xlu0 %v338, 64
  %v354 = vpop.permute.xlu0 %353
  %355 = vrot.lane.b32.xlu0 %v339, 64
  %v356 = vpop.permute.xlu0 %355
  %357 = vrot.lane.b32.xlu0 %v340, 64
  %v358 = vpop.permute.xlu0 %357
  %359 = vrot.lane.b32.xlu0 %v341, 64
  %v360 = vpop.permute.xlu0 %359
  %361 = vrot.lane.b32.xlu0 %v342, 64
  %v362 = vpop.permute.xlu0 %361
  %vm363 = vcmask 523264
  %v366 = vsel %vm363, %v303, %v344
  %v370 = vsel %vm363, %v304, %v346
  %v374 = vsel %vm363, %v305, %v348
  %v378 = vsel %vm363, %v306, %v350
  %v382 = vsel %vm363, %v307, %v352
  %v386 = vsel %vm363, %v308, %v354
  %v390 = vsel %vm363, %v309, %v356
  %v394 = vsel %vm363, %v310, %v358
  %v398 = vsel %vm363, %v311, %v360
  %v402 = vsel %vm363, %v312, %v362
  %v404 = vld [vmem:[%s1] sm:$0xf]
  %v405 = vld [vmem:[%s1 + $0x4] sm:$0xf]
  %v406 = vld [vmem:[%s1 + $0x8] sm:$0xf]
  %v407 = vld [vmem:[%s1 + $0xc] sm:$0xf]
  %v408 = vld [vmem:[%s1 + $0x10] sm:$0xf]
  %v409 = vld [vmem:[%s1 + $0x14] sm:$0xf]
  %v410 = vld [vmem:[%s1 + $0x18] sm:$0xf]
  %v411 = vld [vmem:[%s1 + $0x1c] sm:$0xf]
  %v412 = vld [vmem:[%s1 + $0x20] sm:$0xf]
  %v413 = vld [vmem:[%s1 + $0x24] sm:$0xf]
  %v414 = vld [vmem:[%s1 + $0x28] sm:$0xf]
  %v415 = vld [vmem:[%s1 + $0x2c] sm:$0xf]
  %v416 = vld [vmem:[%s1 + $0x30] sm:$0xf]
  %v417 = vld [vmem:[%s1 + $0x34] sm:$0xf]
  %v418 = vld [vmem:[%s1 + $0x38] sm:$0xf]
  %v419 = vld [vmem:[%s1 + $0x3c] sm:$0xf]
  %v420 = vld [vmem:[%s1 + $0x40] sm:$0xf]
  %v421 = vld [vmem:[%s1 + $0x44] sm:$0xf]
  %v422 = vld [vmem:[%s1 + $0x48] sm:$0xf]
  %v423 = vld [vmem:[%s1 + $0x4c] sm:$0xf]
  %v424 = vld [vmem:[%s1 + $0x50] sm:$0xf]
  %v425 = vld [vmem:[%s1 + $0x54] sm:$0xf]
  %v426 = vld [vmem:[%s1 + $0x58] sm:$0xf]
  %v427 = vld [vmem:[%s1 + $0x5c] sm:$0xf]
  %v428 = vld [vmem:[%s1 + $0x60] sm:$0xf]
  %v429 = vld [vmem:[%s1 + $0x64] sm:$0xf]
  %v430 = vld [vmem:[%s1 + $0x68] sm:$0xf]
  %v431 = vld [vmem:[%s1 + $0x6c] sm:$0xf]
  %v432 = vld [vmem:[%s1 + $0x70] sm:$0xf]
  %v433 = vld [vmem:[%s1 + $0x74] sm:$0xf]
  %v434 = vld [vmem:[%s1 + $0x78] sm:$0xf]
  %v435 = vld [vmem:[%s1 + $0x7c] sm:$0xf]
  %v436 = vld [vmem:[%s1 + $0x80] sm:$0xf]
  %v437 = vld [vmem:[%s1 + $0x84] sm:$0xf]
  %v438 = vld [vmem:[%s1 + $0x88] sm:$0xf]
  %v439 = vld [vmem:[%s1 + $0x8c] sm:$0xf]
  %v440 = vld [vmem:[%s1 + $0x90] sm:$0xf]
  %v441 = vld [vmem:[%s1 + $0x94] sm:$0xf]
  %v442 = vld [vmem:[%s1 + $0x98] sm:$0xf]
  %v443 = vld [vmem:[%s1 + $0x9c] sm:$0xf]
  %v444 = vld [vmem:[%s1 + $0xa0] sm:$0xf]
  %v445 = vld [vmem:[%s1 + $0xa4] sm:$0xf]
  %v446 = vld [vmem:[%s1 + $0xa8] sm:$0xf]
  %v447 = vld [vmem:[%s1 + $0xac] sm:$0xf]
  %v448 = vld [vmem:[%s1 + $0xb0] sm:$0xf]
  %v449 = vld [vmem:[%s1 + $0xb4] sm:$0xf]
  %v450 = vld [vmem:[%s1 + $0xb8] sm:$0xf]
  %v451 = vld [vmem:[%s1 + $0xbc] sm:$0xf]
  %v452 = vld [vmem:[%s1 + $0xc0] sm:$0xf]
  %v453 = vld [vmem:[%s1 + $0xc4] sm:$0xf]
  %v454 = vld [vmem:[%s1 + $0xc8] sm:$0xf]
  %v455 = vld [vmem:[%s1 + $0xcc] sm:$0xf]
  %v456 = vld [vmem:[%s1 + $0xd0] sm:$0xf]
  %v457 = vld [vmem:[%s1 + $0xd4] sm:$0xf]
  %v458 = vld [vmem:[%s1 + $0xd8] sm:$0xf]
  %v459 = vld [vmem:[%s1 + $0xdc] sm:$0xf]
  %v460 = vld [vmem:[%s3] sm:$0x1]
  %v461 = vld [vmem:[%s3 + $0x1] sm:$0x1]
  %v462 = vld [vmem:[%s3 + $0x2] sm:$0x1]
  %v479 = vunpack.c.l.b16 %v404
  %v480 = vunpack.c.l.b16 %v405
  %v481 = vunpack.c.l.b16 %v406
  %v482 = vunpack.c.l.b16 %v407
  %v483 = vunpack.c.l.b16 %v408
  %v484 = vunpack.c.l.b16 %v409
  %v485 = vunpack.c.l.b16 %v410
  %v486 = vunpack.c.l.b16 %v411
  %v487 = vunpack.c.l.b16 %v412
  %v488 = vunpack.c.l.b16 %v413
  %v489 = vunpack.c.l.b16 %v414
  %v490 = vunpack.c.l.b16 %v415
  %v491 = vunpack.c.l.b16 %v416
  %v492 = vunpack.c.l.b16 %v417
  %v493 = vunpack.c.l.b16 %v418
  %v494 = vunpack.c.l.b16 %v419
  %v495 = vpack.c.b16 %v480, %v479
  %v496 = vpack.c.b16 %v482, %v481
  %v497 = vpack.c.b16 %v484, %v483
  %v498 = vpack.c.b16 %v486, %v485
  %v499 = vpack.c.b16 %v488, %v487
  %v500 = vpack.c.b16 %v490, %v489
  %v501 = vpack.c.b16 %v492, %v491
  %v502 = vpack.c.b16 %v494, %v493
  %511 = vmatpush.bf16.msra.mxu0 %v502
  %512 = vmatpush.bf16.msra.mxu0 %v501
  %513 = vmatpush.bf16.msra.mxu0 %v500
  %514 = vmatpush.bf16.msra.mxu0 %v499
  %515 = vmatpush.bf16.msra.mxu0 %v498
  %516 = vmatpush.bf16.msra.mxu0 %v497
  %517 = vmatpush.bf16.msra.mxu0 %v496
  %518 = vmatpush.bf16.msra.mxu0 %v495
  %519 = vmatmul.bf16.gmra.mxu0 %v366
  %v520 = vpop.f32.mrf.mxu0
  %v521 = vadd.f32 0.0, %v520
  %v522 = vpop.f32.mrf.mxu0
  %v523 = vadd.f32 0.0, %v522
  %524 = vmatmul.bf16.gmra.mxu0 %v370
  %v525 = vpop.f32.mrf.mxu0
  %v526 = vadd.f32 0.0, %v525
  %v527 = vpop.f32.mrf.mxu0
  %v528 = vadd.f32 0.0, %v527
  %529 = vmatmul.bf16.gmra.mxu0 %v374
  %v530 = vpop.f32.mrf.mxu0
  %v531 = vadd.f32 0.0, %v530
  %v532 = vpop.f32.mrf.mxu0
  %v533 = vadd.f32 0.0, %v532
  %534 = vmatmul.bf16.gmra.mxu0 %v378
  %v535 = vpop.f32.mrf.mxu0
  %v536 = vadd.f32 0.0, %v535
  %v537 = vpop.f32.mrf.mxu0
  %v538 = vadd.f32 0.0, %v537
  %539 = vmatmul.bf16.gmra.mxu0 %v382
  %v540 = vpop.f32.mrf.mxu0
  %v541 = vadd.f32 0.0, %v540
  %v542 = vpop.f32.mrf.mxu0
  %v543 = vadd.f32 0.0, %v542
  %544 = vmatmul.bf16.gmra.mxu0 %v386
  %v545 = vpop.f32.mrf.mxu0
  %v546 = vadd.f32 0.0, %v545
  %v547 = vpop.f32.mrf.mxu0
  %v548 = vadd.f32 0.0, %v547
  %549 = vmatmul.bf16.gmra.mxu0 %v390
  %v550 = vpop.f32.mrf.mxu0
  %v551 = vadd.f32 0.0, %v550
  %v552 = vpop.f32.mrf.mxu0
  %v553 = vadd.f32 0.0, %v552
  %554 = vmatmul.bf16.gmra.mxu0 %v394
  %v555 = vpop.f32.mrf.mxu0
  %v556 = vadd.f32 0.0, %v555
  %v557 = vpop.f32.mrf.mxu0
  %v558 = vadd.f32 0.0, %v557
  %559 = vmatmul.bf16.gmra.mxu0 %v398
  %v560 = vpop.f32.mrf.mxu0
  %v561 = vadd.f32 0.0, %v560
  %v562 = vpop.f32.mrf.mxu0
  %v563 = vadd.f32 0.0, %v562
  %564 = vmatmul.bf16.gmra.mxu0 %v402
  %v565 = vpop.f32.mrf.mxu0
  %v566 = vadd.f32 0.0, %v565
  %v567 = vpop.f32.mrf.mxu0
  %v568 = vadd.f32 0.0, %v567
  %569 = vdwg.mxu0
  %v570 = vmul.f32 %v521, %v521
  %v571 = vmul.f32 %v523, %v523
  %v572 = vmul.f32 %v526, %v526
  %v573 = vmul.f32 %v528, %v528
  %v574 = vmul.f32 %v531, %v531
  %v575 = vmul.f32 %v533, %v533
  %v576 = vmul.f32 %v536, %v536
  %v577 = vmul.f32 %v538, %v538
  %v578 = vmul.f32 %v541, %v541
  %v579 = vmul.f32 %v543, %v543
  %v580 = vmul.f32 %v546, %v546
  %v581 = vmul.f32 %v548, %v548
  %v582 = vmul.f32 %v551, %v551
  %v583 = vmul.f32 %v553, %v553
  %v584 = vmul.f32 %v556, %v556
  %v585 = vmul.f32 %v558, %v558
  %v586 = vmul.f32 %v561, %v561
  %v587 = vmul.f32 %v563, %v563
  %v588 = vmul.f32 %v566, %v566
  %v589 = vmul.f32 %v568, %v568
  %v590 = vpack.c.bf16 %v571, %v570
  %v591 = vpack.c.bf16 %v573, %v572
  %v592 = vpack.c.bf16 %v575, %v574
  %v593 = vpack.c.bf16 %v577, %v576
  %v594 = vpack.c.bf16 %v579, %v578
  %v595 = vpack.c.bf16 %v581, %v580
  %v596 = vpack.c.bf16 %v583, %v582
  %v597 = vpack.c.bf16 %v585, %v584
  %v598 = vpack.c.bf16 %v587, %v586
  %v599 = vpack.c.bf16 %v589, %v588
  %v600 = vld [vmem:[%s2] sm:$0xf]
  %v601 = vld [vmem:[%s2 + $0x4] sm:$0xf]
  %v602 = vld [vmem:[%s2 + $0x8] sm:$0xf]
  %v603 = vld [vmem:[%s2 + $0xc] sm:$0xf]
  %v604 = vld [vmem:[%s2 + $0x10] sm:$0xf]
  %v605 = vld [vmem:[%s2 + $0x14] sm:$0xf]
  %v606 = vld [vmem:[%s2 + $0x18] sm:$0xf]
  %v607 = vld [vmem:[%s2 + $0x1c] sm:$0xf]
  %v608 = vld [vmem:[%s2 + $0x20] sm:$0xf]
  %v609 = vld [vmem:[%s2 + $0x24] sm:$0xf]
  %v610 = vld [vmem:[%s2 + $0x28] sm:$0xf]
  %v611 = vld [vmem:[%s2 + $0x2c] sm:$0xf]
  %v612 = vld [vmem:[%s2 + $0x30] sm:$0xf]
  %v613 = vld [vmem:[%s2 + $0x34] sm:$0xf]
  %v614 = vld [vmem:[%s2 + $0x38] sm:$0xf]
  %v615 = vld [vmem:[%s2 + $0x3c] sm:$0xf]
  %v632 = vunpack.c.l.b16 %v600
  %v633 = vunpack.c.l.b16 %v601
  %v634 = vunpack.c.l.b16 %v602
  %v635 = vunpack.c.l.b16 %v603
  %v636 = vunpack.c.l.b16 %v604
  %v637 = vunpack.c.l.b16 %v605
  %v638 = vunpack.c.l.b16 %v606
  %v639 = vunpack.c.l.b16 %v607
  %v640 = vunpack.c.l.b16 %v608
  %v641 = vunpack.c.l.b16 %v609
  %v642 = vunpack.c.l.b16 %v610
  %v643 = vunpack.c.l.b16 %v611
  %v644 = vunpack.c.l.b16 %v612
  %v645 = vunpack.c.l.b16 %v613
  %v646 = vunpack.c.l.b16 %v614
  %v647 = vunpack.c.l.b16 %v615
  %v648 = vpack.c.b16 %v633, %v632
  %v649 = vpack.c.b16 %v635, %v634
  %v650 = vpack.c.b16 %v637, %v636
  %v651 = vpack.c.b16 %v639, %v638
  %v652 = vpack.c.b16 %v641, %v640
  %v653 = vpack.c.b16 %v643, %v642
  %v654 = vpack.c.b16 %v645, %v644
  %v655 = vpack.c.b16 %v647, %v646
  %664 = vmatpush.bf16.msra.mxu0 %v655
  %665 = vmatpush.bf16.msra.mxu0 %v654
  %666 = vmatpush.bf16.msra.mxu0 %v653
  %667 = vmatpush.bf16.msra.mxu0 %v652
  %668 = vmatpush.bf16.msra.mxu0 %v651
  %669 = vmatpush.bf16.msra.mxu0 %v650
  %670 = vmatpush.bf16.msra.mxu0 %v649
  %671 = vmatpush.bf16.msra.mxu0 %v648
  %672 = vmatmul.bf16.gmra.mxu0 %v590
  %v673 = vpop.f32.mrf.mxu0
  %v674 = vadd.f32 0.0, %v673
  %v675 = vpop.f32.mrf.mxu0
  %v676 = vadd.f32 0.0, %v675
  %677 = vmatmul.bf16.gmra.mxu0 %v591
  %v678 = vpop.f32.mrf.mxu0
  %v679 = vadd.f32 0.0, %v678
  %v680 = vpop.f32.mrf.mxu0
  %v681 = vadd.f32 0.0, %v680
  %682 = vmatmul.bf16.gmra.mxu0 %v592
  %v683 = vpop.f32.mrf.mxu0
  %v684 = vadd.f32 0.0, %v683
  %v685 = vpop.f32.mrf.mxu0
  %v686 = vadd.f32 0.0, %v685
  %687 = vmatmul.bf16.gmra.mxu0 %v593
  %v688 = vpop.f32.mrf.mxu0
  %v689 = vadd.f32 0.0, %v688
  %v690 = vpop.f32.mrf.mxu0
  %v691 = vadd.f32 0.0, %v690
  %692 = vmatmul.bf16.gmra.mxu0 %v594
  %v693 = vpop.f32.mrf.mxu0
  %v694 = vadd.f32 0.0, %v693
  %v695 = vpop.f32.mrf.mxu0
  %v696 = vadd.f32 0.0, %v695
  %697 = vmatmul.bf16.gmra.mxu0 %v595
  %v698 = vpop.f32.mrf.mxu0
  %v699 = vadd.f32 0.0, %v698
  %v700 = vpop.f32.mrf.mxu0
  %v701 = vadd.f32 0.0, %v700
  %702 = vmatmul.bf16.gmra.mxu0 %v596
  %v703 = vpop.f32.mrf.mxu0
  %v704 = vadd.f32 0.0, %v703
  %v705 = vpop.f32.mrf.mxu0
  %v706 = vadd.f32 0.0, %v705
  %707 = vmatmul.bf16.gmra.mxu0 %v597
  %v708 = vpop.f32.mrf.mxu0
  %v709 = vadd.f32 0.0, %v708
  %v710 = vpop.f32.mrf.mxu0
  %v711 = vadd.f32 0.0, %v710
  %712 = vmatmul.bf16.gmra.mxu0 %v598
  %v713 = vpop.f32.mrf.mxu0
  %v714 = vadd.f32 0.0, %v713
  %v715 = vpop.f32.mrf.mxu0
  %v716 = vadd.f32 0.0, %v715
  %717 = vmatmul.bf16.gmra.mxu0 %v599
  %v718 = vpop.f32.mrf.mxu0
  %v719 = vadd.f32 0.0, %v718
  %v720 = vpop.f32.mrf.mxu0
  %v721 = vadd.f32 0.0, %v720
  %722 = vdwg.mxu0
  %v723 = vmax.f32 %v674, 1e-05
  %v724 = vmax.f32 %v676, 1e-05
  %v725 = vmax.f32 %v679, 1e-05
  %v726 = vmax.f32 %v681, 1e-05
  %v727 = vmax.f32 %v684, 1e-05
  %v728 = vmax.f32 %v686, 1e-05
  %v729 = vmax.f32 %v689, 1e-05
  %v730 = vmax.f32 %v691, 1e-05
  %v731 = vmax.f32 %v694, 1e-05
  %v732 = vmax.f32 %v696, 1e-05
  %v733 = vmax.f32 %v699, 1e-05
  %v734 = vmax.f32 %v701, 1e-05
  %v735 = vmax.f32 %v704, 1e-05
  %v736 = vmax.f32 %v706, 1e-05
  %v737 = vmax.f32 %v709, 1e-05
  %v738 = vmax.f32 %v711, 1e-05
  %v739 = vmax.f32 %v714, 1e-05
  %v740 = vmax.f32 %v716, 1e-05
  %v741 = vmax.f32 %v719, 1e-05
  %v742 = vmax.f32 %v721, 1e-05
  %v743 = vlog2.pop %v723
  %v744 = vmul.f32 %v743, 0.6931472
  %v745 = vlog2.pop %v724
  %v746 = vmul.f32 %v745, 0.6931472
  %v747 = vlog2.pop %v725
  %v748 = vmul.f32 %v747, 0.6931472
  %v749 = vlog2.pop %v726
  %v750 = vmul.f32 %v749, 0.6931472
  %v751 = vlog2.pop %v727
  %v752 = vmul.f32 %v751, 0.6931472
  %v753 = vlog2.pop %v728
  %v754 = vmul.f32 %v753, 0.6931472
  %v755 = vlog2.pop %v729
  %v756 = vmul.f32 %v755, 0.6931472
  %v757 = vlog2.pop %v730
  %v758 = vmul.f32 %v757, 0.6931472
  %v759 = vlog2.pop %v731
  %v760 = vmul.f32 %v759, 0.6931472
  %v761 = vlog2.pop %v732
  %v762 = vmul.f32 %v761, 0.6931472
  %v763 = vlog2.pop %v733
  %v764 = vmul.f32 %v763, 0.6931472
  %v765 = vlog2.pop %v734
  %v766 = vmul.f32 %v765, 0.6931472
  %v767 = vlog2.pop %v735
  %v768 = vmul.f32 %v767, 0.6931472
  %v769 = vlog2.pop %v736
  %v770 = vmul.f32 %v769, 0.6931472
  %v771 = vlog2.pop %v737
  %v772 = vmul.f32 %v771, 0.6931472
  %v773 = vlog2.pop %v738
  %v774 = vmul.f32 %v773, 0.6931472
  %v775 = vlog2.pop %v739
  %v776 = vmul.f32 %v775, 0.6931472
  %v777 = vlog2.pop %v740
  %v778 = vmul.f32 %v777, 0.6931472
  %v779 = vlog2.pop %v741
  %v780 = vmul.f32 %v779, 0.6931472
  %v781 = vlog2.pop %v742
  %v782 = vmul.f32 %v781, 0.6931472
  %v783 = vmul.f32 %v744, 0.4342945
  %v784 = vmul.f32 %v746, 0.4342945
  %v785 = vmul.f32 %v748, 0.4342945
  %v786 = vmul.f32 %v750, 0.4342945
  %v787 = vmul.f32 %v752, 0.4342945
  %v788 = vmul.f32 %v754, 0.4342945
  %v789 = vmul.f32 %v756, 0.4342945
  %v790 = vmul.f32 %v758, 0.4342945
  %v791 = vmul.f32 %v760, 0.4342945
  %v792 = vmul.f32 %v762, 0.4342945
  %v793 = vmul.f32 %v764, 0.4342945
  %v794 = vmul.f32 %v766, 0.4342945
  %v795 = vmul.f32 %v768, 0.4342945
  %v796 = vmul.f32 %v770, 0.4342945
  %v797 = vmul.f32 %v772, 0.4342945
  %v798 = vmul.f32 %v774, 0.4342945
  %v799 = vmul.f32 %v776, 0.4342945
  %v800 = vmul.f32 %v778, 0.4342945
  %v801 = vmul.f32 %v780, 0.4342945
  %v802 = vmul.f32 %v782, 0.4342945
  %v803 = vmul.f32 %v783, 20.0
  %v804 = vmul.f32 %v784, 20.0
  %v805 = vmul.f32 %v785, 20.0
  %v806 = vmul.f32 %v786, 20.0
  %v807 = vmul.f32 %v787, 20.0
  %v808 = vmul.f32 %v788, 20.0
  %v809 = vmul.f32 %v789, 20.0
  %v810 = vmul.f32 %v790, 20.0
  %v811 = vmul.f32 %v791, 20.0
  %v812 = vmul.f32 %v792, 20.0
  %v813 = vmul.f32 %v793, 20.0
  %v814 = vmul.f32 %v794, 20.0
  %v815 = vmul.f32 %v795, 20.0
  %v816 = vmul.f32 %v796, 20.0
  %v817 = vmul.f32 %v797, 20.0
  %v818 = vmul.f32 %v798, 20.0
  %v819 = vmul.f32 %v799, 20.0
  %v820 = vmul.f32 %v800, 20.0
  %v821 = vmul.f32 %v801, 20.0
  %v822 = vmul.f32 %v802, 20.0
  %v823 = vmax.f32 %v803, -50.0
  %v824 = vmax.f32 %v804, -50.0
  %v825 = vmax.f32 %v805, -50.0
  %v826 = vmax.f32 %v806, -50.0
  %v827 = vmax.f32 %v807, -50.0
  %v828 = vmax.f32 %v808, -50.0
  %v829 = vmax.f32 %v809, -50.0
  %v830 = vmax.f32 %v810, -50.0
  %v831 = vmax.f32 %v811, -50.0
  %v832 = vmax.f32 %v812, -50.0
  %v833 = vmax.f32 %v813, -50.0
  %v834 = vmax.f32 %v814, -50.0
  %v835 = vmax.f32 %v815, -50.0
  %v836 = vmax.f32 %v816, -50.0
  %v837 = vmax.f32 %v817, -50.0
  %v838 = vmax.f32 %v818, -50.0
  %v839 = vmax.f32 %v819, -50.0
  %v840 = vmax.f32 %v820, -50.0
  %v841 = vmax.f32 %v821, -50.0
  %v842 = vmax.f32 %v822, -50.0
  %v843 = vmin.f32 %v823, 80.0
  %v844 = vmin.f32 %v824, 80.0
  %v845 = vmin.f32 %v825, 80.0
  %v846 = vmin.f32 %v826, 80.0
  %v847 = vmin.f32 %v827, 80.0
  %v848 = vmin.f32 %v828, 80.0
  %v849 = vmin.f32 %v829, 80.0
  %v850 = vmin.f32 %v830, 80.0
  %v851 = vmin.f32 %v831, 80.0
  %v852 = vmin.f32 %v832, 80.0
  %v853 = vmin.f32 %v833, 80.0
  %v854 = vmin.f32 %v834, 80.0
  %v855 = vmin.f32 %v835, 80.0
  %v856 = vmin.f32 %v836, 80.0
  %v857 = vmin.f32 %v837, 80.0
  %v858 = vmin.f32 %v838, 80.0
  %v859 = vmin.f32 %v839, 80.0
  %v860 = vmin.f32 %v840, 80.0
  %v861 = vmin.f32 %v841, 80.0
  %v862 = vmin.f32 %v842, 80.0
  %v863 = vsel %vm363, %v843, inf
  %864 = vmin.xlane.f32.xlu0 %v863
  %v865 = vpop.xlane.xlu0 %864
  %v866 = vsel %vm363, %v844, inf
  %867 = vmin.xlane.f32.xlu0 %v866
  %v868 = vpop.xlane.xlu0 %867
  %v869 = vsel %vm363, %v845, inf
  %870 = vmin.xlane.f32.xlu0 %v869
  %v871 = vpop.xlane.xlu0 %870
  %v872 = vsel %vm363, %v846, inf
  %873 = vmin.xlane.f32.xlu0 %v872
  %v874 = vpop.xlane.xlu0 %873
  %v875 = vsel %vm363, %v847, inf
  %876 = vmin.xlane.f32.xlu0 %v875
  %v877 = vpop.xlane.xlu0 %876
  %v878 = vsel %vm363, %v848, inf
  %879 = vmin.xlane.f32.xlu0 %v878
  %v880 = vpop.xlane.xlu0 %879
  %v881 = vsel %vm363, %v849, inf
  %882 = vmin.xlane.f32.xlu0 %v881
  %v883 = vpop.xlane.xlu0 %882
  %v884 = vsel %vm363, %v850, inf
  %885 = vmin.xlane.f32.xlu0 %v884
  %v886 = vpop.xlane.xlu0 %885
  %v887 = vsel %vm363, %v851, inf
  %888 = vmin.xlane.f32.xlu0 %v887
  %v889 = vpop.xlane.xlu0 %888
  %v890 = vsel %vm363, %v852, inf
  %891 = vmin.xlane.f32.xlu0 %v890
  %v892 = vpop.xlane.xlu0 %891
  %v893 = vsel %vm363, %v853, inf
  %894 = vmin.xlane.f32.xlu0 %v893
  %v895 = vpop.xlane.xlu0 %894
  %v896 = vsel %vm363, %v854, inf
  %897 = vmin.xlane.f32.xlu0 %v896
  %v898 = vpop.xlane.xlu0 %897
  %v899 = vsel %vm363, %v855, inf
  %900 = vmin.xlane.f32.xlu0 %v899
  %v901 = vpop.xlane.xlu0 %900
  %v902 = vsel %vm363, %v856, inf
  %903 = vmin.xlane.f32.xlu0 %v902
  %v904 = vpop.xlane.xlu0 %903
  %v905 = vsel %vm363, %v857, inf
  %906 = vmin.xlane.f32.xlu0 %v905
  %v907 = vpop.xlane.xlu0 %906
  %v908 = vsel %vm363, %v858, inf
  %909 = vmin.xlane.f32.xlu0 %v908
  %v910 = vpop.xlane.xlu0 %909
  %v911 = vsel %vm363, %v859, inf
  %912 = vmin.xlane.f32.xlu0 %v911
  %v913 = vpop.xlane.xlu0 %912
  %v914 = vsel %vm363, %v860, inf
  %915 = vmin.xlane.f32.xlu0 %v914
  %v916 = vpop.xlane.xlu0 %915
  %v917 = vsel %vm363, %v861, inf
  %918 = vmin.xlane.f32.xlu0 %v917
  %v919 = vpop.xlane.xlu0 %918
  %v920 = vsel %vm363, %v862, inf
  %921 = vmin.xlane.f32.xlu0 %v920
  %v922 = vpop.xlane.xlu0 %921
  %v923 = vmin.f32 %v865, %v868
  %v924 = vmin.f32 %v923, %v871
  %v925 = vmin.f32 %v924, %v874
  %v926 = vmin.f32 %v925, %v877
  %v927 = vrot.slane %v926, 4
  %v928 = vmin.f32 %v926, %v927
  %v929 = vrot.slane %v928, 2
  %v930 = vmin.f32 %v928, %v929
  %v931 = vrot.slane %v930, 1
  %v932 = vmin.f32 %v930, %v931
  %v933 = vmin.f32 %v880, %v883
  %v934 = vmin.f32 %v933, %v886
  %v935 = vmin.f32 %v934, %v889
  %v936 = vmin.f32 %v935, %v892
  %v937 = vrot.slane %v936, 4
  %v938 = vmin.f32 %v936, %v937
  %v939 = vrot.slane %v938, 2
  %v940 = vmin.f32 %v938, %v939
  %v941 = vrot.slane %v940, 1
  %v942 = vmin.f32 %v940, %v941
  %v943 = vmin.f32 %v895, %v898
  %v944 = vmin.f32 %v943, %v901
  %v945 = vmin.f32 %v944, %v904
  %v946 = vmin.f32 %v945, %v907
  %v947 = vrot.slane %v946, 4
  %v948 = vmin.f32 %v946, %v947
  %v949 = vrot.slane %v948, 2
  %v950 = vmin.f32 %v948, %v949
  %v951 = vrot.slane %v950, 1
  %v952 = vmin.f32 %v950, %v951
  %v953 = vmin.f32 %v910, %v913
  %v954 = vmin.f32 %v953, %v916
  %v955 = vmin.f32 %v954, %v919
  %v956 = vmin.f32 %v955, %v922
  %v957 = vrot.slane %v956, 4
  %v958 = vmin.f32 %v956, %v957
  %v959 = vrot.slane %v958, 2
  %v960 = vmin.f32 %v958, %v959
  %v961 = vrot.slane %v960, 1
  %v962 = vmin.f32 %v960, %v961
  %v963 = vsel %vm363, %v843, -inf
  %964 = vmax.xlane.f32.xlu0 %v963
  %v965 = vpop.xlane.xlu0 %964
  %v966 = vsel %vm363, %v844, -inf
  %967 = vmax.xlane.f32.xlu0 %v966
  %v968 = vpop.xlane.xlu0 %967
  %v969 = vsel %vm363, %v845, -inf
  %970 = vmax.xlane.f32.xlu0 %v969
  %v971 = vpop.xlane.xlu0 %970
  %v972 = vsel %vm363, %v846, -inf
  %973 = vmax.xlane.f32.xlu0 %v972
  %v974 = vpop.xlane.xlu0 %973
  %v975 = vsel %vm363, %v847, -inf
  %976 = vmax.xlane.f32.xlu0 %v975
  %v977 = vpop.xlane.xlu0 %976
  %v978 = vsel %vm363, %v848, -inf
  %979 = vmax.xlane.f32.xlu0 %v978
  %v980 = vpop.xlane.xlu0 %979
  %v981 = vsel %vm363, %v849, -inf
  %982 = vmax.xlane.f32.xlu0 %v981
  %v983 = vpop.xlane.xlu0 %982
  %v984 = vsel %vm363, %v850, -inf
  %985 = vmax.xlane.f32.xlu0 %v984
  %v986 = vpop.xlane.xlu0 %985
  %v987 = vsel %vm363, %v851, -inf
  %988 = vmax.xlane.f32.xlu0 %v987
  %v989 = vpop.xlane.xlu0 %988
  %v990 = vsel %vm363, %v852, -inf
  %991 = vmax.xlane.f32.xlu0 %v990
  %v992 = vpop.xlane.xlu0 %991
  %v993 = vsel %vm363, %v853, -inf
  %994 = vmax.xlane.f32.xlu0 %v993
  %v995 = vpop.xlane.xlu0 %994
  %v996 = vsel %vm363, %v854, -inf
  %997 = vmax.xlane.f32.xlu0 %v996
  %v998 = vpop.xlane.xlu0 %997
  %v999 = vsel %vm363, %v855, -inf
  %1000 = vmax.xlane.f32.xlu0 %v999
  %v1001 = vpop.xlane.xlu0 %1000
  %v1002 = vsel %vm363, %v856, -inf
  %1003 = vmax.xlane.f32.xlu0 %v1002
  %v1004 = vpop.xlane.xlu0 %1003
  %v1005 = vsel %vm363, %v857, -inf
  %1006 = vmax.xlane.f32.xlu0 %v1005
  %v1007 = vpop.xlane.xlu0 %1006
  %v1008 = vsel %vm363, %v858, -inf
  %1009 = vmax.xlane.f32.xlu0 %v1008
  %v1010 = vpop.xlane.xlu0 %1009
  %v1011 = vsel %vm363, %v859, -inf
  %1012 = vmax.xlane.f32.xlu0 %v1011
  %v1013 = vpop.xlane.xlu0 %1012
  %v1014 = vsel %vm363, %v860, -inf
  %1015 = vmax.xlane.f32.xlu0 %v1014
  %v1016 = vpop.xlane.xlu0 %1015
  %v1017 = vsel %vm363, %v861, -inf
  %1018 = vmax.xlane.f32.xlu0 %v1017
  %v1019 = vpop.xlane.xlu0 %1018
  %v1020 = vsel %vm363, %v862, -inf
  %1021 = vmax.xlane.f32.xlu0 %v1020
  %v1022 = vpop.xlane.xlu0 %1021
  %v1023 = vmax.f32 %v965, %v968
  %v1024 = vmax.f32 %v1023, %v971
  %v1025 = vmax.f32 %v1024, %v974
  %v1026 = vmax.f32 %v1025, %v977
  %v1027 = vrot.slane %v1026, 4
  %v1028 = vmax.f32 %v1026, %v1027
  %v1029 = vrot.slane %v1028, 2
  %v1030 = vmax.f32 %v1028, %v1029
  %v1031 = vrot.slane %v1030, 1
  %v1032 = vmax.f32 %v1030, %v1031
  %v1033 = vmax.f32 %v980, %v983
  %v1034 = vmax.f32 %v1033, %v986
  %v1035 = vmax.f32 %v1034, %v989
  %v1036 = vmax.f32 %v1035, %v992
  %v1037 = vrot.slane %v1036, 4
  %v1038 = vmax.f32 %v1036, %v1037
  %v1039 = vrot.slane %v1038, 2
  %v1040 = vmax.f32 %v1038, %v1039
  %v1041 = vrot.slane %v1040, 1
  %v1042 = vmax.f32 %v1040, %v1041
  %v1043 = vmax.f32 %v995, %v998
  %v1044 = vmax.f32 %v1043, %v1001
  %v1045 = vmax.f32 %v1044, %v1004
  %v1046 = vmax.f32 %v1045, %v1007
  %v1047 = vrot.slane %v1046, 4
  %v1048 = vmax.f32 %v1046, %v1047
  %v1049 = vrot.slane %v1048, 2
  %v1050 = vmax.f32 %v1048, %v1049
  %v1051 = vrot.slane %v1050, 1
  %v1052 = vmax.f32 %v1050, %v1051
  %v1053 = vmax.f32 %v1010, %v1013
  %v1054 = vmax.f32 %v1053, %v1016
  %v1055 = vmax.f32 %v1054, %v1019
  %v1056 = vmax.f32 %v1055, %v1022
  %v1057 = vrot.slane %v1056, 4
  %v1058 = vmax.f32 %v1056, %v1057
  %v1059 = vrot.slane %v1058, 2
  %v1060 = vmax.f32 %v1058, %v1059
  %v1061 = vrot.slane %v1060, 1
  %v1062 = vmax.f32 %v1060, %v1061
  %v1063 = vsub.f32 %v843, %v932
  %v1064 = vsub.f32 %v844, %v932
  %v1065 = vsub.f32 %v845, %v932
  %v1066 = vsub.f32 %v846, %v932
  %v1067 = vsub.f32 %v847, %v932
  %v1068 = vsub.f32 %v848, %v942
  %v1069 = vsub.f32 %v849, %v942
  %v1070 = vsub.f32 %v850, %v942
  %v1071 = vsub.f32 %v851, %v942
  %v1072 = vsub.f32 %v852, %v942
  %v1073 = vsub.f32 %v853, %v952
  %v1074 = vsub.f32 %v854, %v952
  %v1075 = vsub.f32 %v855, %v952
  %v1076 = vsub.f32 %v856, %v952
  %v1077 = vsub.f32 %v857, %v952
  %v1078 = vsub.f32 %v858, %v962
  %v1079 = vsub.f32 %v859, %v962
  %v1080 = vsub.f32 %v860, %v962
  %v1081 = vsub.f32 %v861, %v962
  %v1082 = vsub.f32 %v862, %v962
  %v1083 = vsub.f32 %v1032, %v932
  %v1084 = vsub.f32 %v1042, %v942
  %v1085 = vsub.f32 %v1052, %v952
  %v1086 = vsub.f32 %v1062, %v962
  %v1087 = vadd.f32 %v1083, 1e-08
  %v1088 = vadd.f32 %v1084, 1e-08
  %v1089 = vadd.f32 %v1085, 1e-08
  %v1090 = vadd.f32 %v1086, 1e-08
  %v1091 = vrcp.pop %v1087
  %v1092 = vmul.f32 %v1087, %v1091
  %v1093 = vsub.f32 1.0, %v1092
  %v1094 = vmul.f32 %v1091, %v1093
  %v1095 = vadd.f32 %v1091, %v1094
  %vm1096 = vweird.f32 %v1087
  %vm1097 = vweird.f32 %v1091
  %vm1098 = vmor %vm1096, %vm1097
  %v1099 = vsel %vm1098, %v1091, %v1095
  %v1100 = vand.u32 2147483647, %v1087
  %vm1101 = vcmp.eq.f32.partialorder %v1100, 8.507059e+37
  %v1102 = vand.u32 %v1087, 2147483648
  %v1103 = vor.u32 1.1754944e-38, %v1102
  %v1104 = vsel %vm1101, %v1103, %v1099
  %v1105 = vmul.f32 %v1063, %v1104
  %v1106 = vmul.f32 %v1064, %v1104
  %v1107 = vmul.f32 %v1065, %v1104
  %v1108 = vmul.f32 %v1066, %v1104
  %v1109 = vmul.f32 %v1067, %v1104
  %v1110 = vrcp.pop %v1088
  %v1111 = vmul.f32 %v1088, %v1110
  %v1112 = vsub.f32 1.0, %v1111
  %v1113 = vmul.f32 %v1110, %v1112
  %v1114 = vadd.f32 %v1110, %v1113
  %vm1115 = vweird.f32 %v1088
  %vm1116 = vweird.f32 %v1110
  %vm1117 = vmor %vm1115, %vm1116
  %v1118 = vsel %vm1117, %v1110, %v1114
  %v1119 = vand.u32 2147483647, %v1088
  %vm1120 = vcmp.eq.f32.partialorder %v1119, 8.507059e+37
  %v1121 = vand.u32 %v1088, 2147483648
  %v1122 = vor.u32 1.1754944e-38, %v1121
  %v1123 = vsel %vm1120, %v1122, %v1118
  %v1124 = vmul.f32 %v1068, %v1123
  %v1125 = vmul.f32 %v1069, %v1123
  %v1126 = vmul.f32 %v1070, %v1123
  %v1127 = vmul.f32 %v1071, %v1123
  %v1128 = vmul.f32 %v1072, %v1123
  %v1129 = vrcp.pop %v1089
  %v1130 = vmul.f32 %v1089, %v1129
  %v1131 = vsub.f32 1.0, %v1130
  %v1132 = vmul.f32 %v1129, %v1131
  %v1133 = vadd.f32 %v1129, %v1132
  %vm1134 = vweird.f32 %v1089
  %vm1135 = vweird.f32 %v1129
  %vm1136 = vmor %vm1134, %vm1135
  %v1137 = vsel %vm1136, %v1129, %v1133
  %v1138 = vand.u32 2147483647, %v1089
  %vm1139 = vcmp.eq.f32.partialorder %v1138, 8.507059e+37
  %v1140 = vand.u32 %v1089, 2147483648
  %v1141 = vor.u32 1.1754944e-38, %v1140
  %v1142 = vsel %vm1139, %v1141, %v1137
  %v1143 = vmul.f32 %v1073, %v1142
  %v1144 = vmul.f32 %v1074, %v1142
  %v1145 = vmul.f32 %v1075, %v1142
  %v1146 = vmul.f32 %v1076, %v1142
  %v1147 = vmul.f32 %v1077, %v1142
  %v1148 = vrcp.pop %v1090
  %v1149 = vmul.f32 %v1090, %v1148
  %v1150 = vsub.f32 1.0, %v1149
  %v1151 = vmul.f32 %v1148, %v1150
  %v1152 = vadd.f32 %v1148, %v1151
  %vm1153 = vweird.f32 %v1090
  %vm1154 = vweird.f32 %v1148
  %vm1155 = vmor %vm1153, %vm1154
  %v1156 = vsel %vm1155, %v1148, %v1152
  %v1157 = vand.u32 2147483647, %v1090
  %vm1158 = vcmp.eq.f32.partialorder %v1157, 8.507059e+37
  %v1159 = vand.u32 %v1090, 2147483648
  %v1160 = vor.u32 1.1754944e-38, %v1159
  %v1161 = vsel %vm1158, %v1160, %v1156
  %v1162 = vmul.f32 %v1078, %v1161
  %v1163 = vmul.f32 %v1079, %v1161
  %v1164 = vmul.f32 %v1080, %v1161
  %v1165 = vmul.f32 %v1081, %v1161
  %v1166 = vmul.f32 %v1082, %v1161
  %v1167 = vpack.c.bf16 %v1105, %v1105
  %v1168 = vpack.c.bf16 %v1106, %v1106
  %v1169 = vpack.c.bf16 %v1107, %v1107
  %v1170 = vpack.c.bf16 %v1108, %v1108
  %v1171 = vpack.c.bf16 %v1109, %v1109
  %v1172 = vpack.c.bf16 %v1124, %v1124
  %v1173 = vpack.c.bf16 %v1125, %v1125
  %v1174 = vpack.c.bf16 %v1126, %v1126
  %v1175 = vpack.c.bf16 %v1127, %v1127
  %v1176 = vpack.c.bf16 %v1128, %v1128
  %v1177 = vpack.c.bf16 %v1143, %v1143
  %v1178 = vpack.c.bf16 %v1144, %v1144
  %v1179 = vpack.c.bf16 %v1145, %v1145
  %v1180 = vpack.c.bf16 %v1146, %v1146
  %v1181 = vpack.c.bf16 %v1147, %v1147
  %v1182 = vpack.c.bf16 %v1162, %v1162
  %v1183 = vpack.c.bf16 %v1163, %v1163
  %v1184 = vpack.c.bf16 %v1164, %v1164
  %v1185 = vpack.c.bf16 %v1165, %v1165
  %v1186 = vpack.c.bf16 %v1166, %v1166
  %vm1187 = vcmask 519168
  %1188 = vst.msk [vmem:[%s4] sm:$0xf] %vm1187, %v1167
  %1189 = vst.msk [vmem:[%s4 + $0x4] sm:$0xf] %vm1187, %v1168
  %1190 = vst.msk [vmem:[%s4 + $0x8] sm:$0xf] %vm1187, %v1169
  %1191 = vst.msk [vmem:[%s4 + $0xc] sm:$0xf] %vm1187, %v1170
  %1192 = vst.msk [vmem:[%s4 + $0x10] sm:$0xf] %vm1187, %v1171
  %1193 = vst.msk [vmem:[%s4 + $0x14] sm:$0xf] %vm1187, %v1172
  %1194 = vst.msk [vmem:[%s4 + $0x18] sm:$0xf] %vm1187, %v1173
  %1195 = vst.msk [vmem:[%s4 + $0x1c] sm:$0xf] %vm1187, %v1174
  %1196 = vst.msk [vmem:[%s4 + $0x20] sm:$0xf] %vm1187, %v1175
  %1197 = vst.msk [vmem:[%s4 + $0x24] sm:$0xf] %vm1187, %v1176
  %1198 = vst.msk [vmem:[%s4 + $0x28] sm:$0xf] %vm1187, %v1177
  %1199 = vst.msk [vmem:[%s4 + $0x2c] sm:$0xf] %vm1187, %v1178
  %1200 = vst.msk [vmem:[%s4 + $0x30] sm:$0xf] %vm1187, %v1179
  %1201 = vst.msk [vmem:[%s4 + $0x34] sm:$0xf] %vm1187, %v1180
  %1202 = vst.msk [vmem:[%s4 + $0x38] sm:$0xf] %vm1187, %v1181
  %1203 = vst.msk [vmem:[%s4 + $0x3c] sm:$0xf] %vm1187, %v1182
  %1204 = vst.msk [vmem:[%s4 + $0x40] sm:$0xf] %vm1187, %v1183
  %1205 = vst.msk [vmem:[%s4 + $0x44] sm:$0xf] %vm1187, %v1184
  %1206 = vst.msk [vmem:[%s4 + $0x48] sm:$0xf] %vm1187, %v1185
  %1207 = vst.msk [vmem:[%s4 + $0x4c] sm:$0xf] %vm1187, %v1186
  %v1208 = vpack.c.bf16 %v1106, %v1105
  %v1209 = vpack.c.bf16 %v1108, %v1107
  %v1210 = vpack.c.bf16 %v1124, %v1109
  %v1211 = vpack.c.bf16 %v1126, %v1125
  %v1212 = vpack.c.bf16 %v1128, %v1127
  %v1213 = vpack.c.bf16 %v1144, %v1143
  %v1214 = vpack.c.bf16 %v1146, %v1145
  %v1215 = vpack.c.bf16 %v1162, %v1147
  %v1216 = vpack.c.bf16 %v1164, %v1163
  %v1217 = vpack.c.bf16 %v1166, %v1165
  %v1218 = vperm.slane %v460, 0
  %v1227 = vunpack.c.l.b16 %v420
  %v1228 = vunpack.c.l.b16 %v421
  %v1229 = vunpack.c.l.b16 %v422
  %v1230 = vunpack.c.l.b16 %v423
  %v1231 = vunpack.c.l.b16 %v424
  %v1232 = vunpack.c.l.b16 %v425
  %v1233 = vunpack.c.l.b16 %v426
  %v1234 = vunpack.c.l.b16 %v427
  %v1235 = vpack.c.b16 %v1228, %v1227
  %v1236 = vpack.c.b16 %v1230, %v1229
  %v1237 = vpack.c.b16 %v1232, %v1231
  %v1238 = vpack.c.b16 %v1234, %v1233
  %v1244 = vsel %vm363, %v1208, 0
  %v1247 = vsel %vm363, %v1209, 0
  %v1250 = vsel %vm363, %v1210, 0
  %v1253 = vsel %vm363, %v1211, 0
  %v1256 = vsel %vm363, %v1212, 0
  %v1259 = vsel %vm363, %v1213, 0
  %v1262 = vsel %vm363, %v1214, 0
  %v1265 = vsel %vm363, %v1215, 0
  %v1268 = vsel %vm363, %v1216, 0
  %v1271 = vsel %vm363, %v1217, 0
  %1273 = vmatpush.bf16.msra.mxu0 0
  %1274 = vmatpush.bf16.msra.mxu0 0
  %1275 = vmatpush.bf16.msra.mxu0 0
  %1276 = vmatpush.bf16.msra.mxu0 0
  %1277 = vmatpush.bf16.msra.mxu0 %v1238
  %1278 = vmatpush.bf16.msra.mxu0 %v1237
  %1279 = vmatpush.bf16.msra.mxu0 %v1236
  %1280 = vmatpush.bf16.msra.mxu0 %v1235
  %1281 = vmatmul.bf16.gmra.mxu0 %v1244
  %v1282 = vpop.f32.mrf.mxu0
  %v1283 = vadd.f32 %v1218, %v1282
  %v1284 = vpop.f32.mrf.mxu0
  %v1285 = vadd.f32 %v1218, %v1284
  %1286 = vmatmul.bf16.gmra.mxu0 %v1247
  %v1287 = vpop.f32.mrf.mxu0
  %v1288 = vadd.f32 %v1218, %v1287
  %v1289 = vpop.f32.mrf.mxu0
  %v1290 = vadd.f32 %v1218, %v1289
  %1291 = vmatmul.bf16.gmra.mxu0 %v1250
  %v1292 = vpop.f32.mrf.mxu0
  %v1293 = vadd.f32 %v1218, %v1292
  %v1294 = vpop.f32.mrf.mxu0
  %v1295 = vadd.f32 %v1218, %v1294
  %1296 = vmatmul.bf16.gmra.mxu0 %v1253
  %v1297 = vpop.f32.mrf.mxu0
  %v1298 = vadd.f32 %v1218, %v1297
  %v1299 = vpop.f32.mrf.mxu0
  %v1300 = vadd.f32 %v1218, %v1299
  %1301 = vmatmul.bf16.gmra.mxu0 %v1256
  %v1302 = vpop.f32.mrf.mxu0
  %v1303 = vadd.f32 %v1218, %v1302
  %v1304 = vpop.f32.mrf.mxu0
  %v1305 = vadd.f32 %v1218, %v1304
  %1306 = vmatmul.bf16.gmra.mxu0 %v1259
  %v1307 = vpop.f32.mrf.mxu0
  %v1308 = vadd.f32 %v1218, %v1307
  %v1309 = vpop.f32.mrf.mxu0
  %v1310 = vadd.f32 %v1218, %v1309
  %1311 = vmatmul.bf16.gmra.mxu0 %v1262
  %v1312 = vpop.f32.mrf.mxu0
  %v1313 = vadd.f32 %v1218, %v1312
  %v1314 = vpop.f32.mrf.mxu0
  %v1315 = vadd.f32 %v1218, %v1314
  %1316 = vmatmul.bf16.gmra.mxu0 %v1265
  %v1317 = vpop.f32.mrf.mxu0
  %v1318 = vadd.f32 %v1218, %v1317
  %v1319 = vpop.f32.mrf.mxu0
  %v1320 = vadd.f32 %v1218, %v1319
  %1321 = vmatmul.bf16.gmra.mxu0 %v1268
  %v1322 = vpop.f32.mrf.mxu0
  %v1323 = vadd.f32 %v1218, %v1322
  %v1324 = vpop.f32.mrf.mxu0
  %v1325 = vadd.f32 %v1218, %v1324
  %1326 = vmatmul.bf16.gmra.mxu0 %v1271
  %v1327 = vpop.f32.mrf.mxu0
  %v1328 = vadd.f32 %v1218, %v1327
  %v1329 = vpop.f32.mrf.mxu0
  %v1330 = vadd.f32 %v1218, %v1329
  %1331 = vdwg.mxu0
  %v1332 = vmax.f32 %v1283, 0.0
  %v1333 = vmax.f32 %v1285, 0.0
  %v1334 = vmax.f32 %v1288, 0.0
  %v1335 = vmax.f32 %v1290, 0.0
  %v1336 = vmax.f32 %v1293, 0.0
  %v1337 = vmax.f32 %v1295, 0.0
  %v1338 = vmax.f32 %v1298, 0.0
  %v1339 = vmax.f32 %v1300, 0.0
  %v1340 = vmax.f32 %v1303, 0.0
  %v1341 = vmax.f32 %v1305, 0.0
  %v1342 = vmax.f32 %v1308, 0.0
  %v1343 = vmax.f32 %v1310, 0.0
  %v1344 = vmax.f32 %v1313, 0.0
  %v1345 = vmax.f32 %v1315, 0.0
  %v1346 = vmax.f32 %v1318, 0.0
  %v1347 = vmax.f32 %v1320, 0.0
  %v1348 = vmax.f32 %v1323, 0.0
  %v1349 = vmax.f32 %v1325, 0.0
  %v1350 = vmax.f32 %v1328, 0.0
  %v1351 = vmax.f32 %v1330, 0.0
  %v1352 = vpack.c.bf16 %v1333, %v1332
  %v1353 = vpack.c.bf16 %v1335, %v1334
  %v1354 = vpack.c.bf16 %v1337, %v1336
  %v1355 = vpack.c.bf16 %v1339, %v1338
  %v1356 = vpack.c.bf16 %v1341, %v1340
  %v1357 = vpack.c.bf16 %v1343, %v1342
  %v1358 = vpack.c.bf16 %v1345, %v1344
  %v1359 = vpack.c.bf16 %v1347, %v1346
  %v1360 = vpack.c.bf16 %v1349, %v1348
  %v1361 = vpack.c.bf16 %v1351, %v1350
  %v1362 = vperm.slane %v461, 0
  %v1379 = vunpack.c.l.b16 %v428
  %v1380 = vunpack.c.l.b16 %v429
  %v1381 = vunpack.c.l.b16 %v430
  %v1382 = vunpack.c.l.b16 %v431
  %v1383 = vunpack.c.l.b16 %v432
  %v1384 = vunpack.c.l.b16 %v433
  %v1385 = vunpack.c.l.b16 %v434
  %v1386 = vunpack.c.l.b16 %v435
  %v1387 = vunpack.c.l.b16 %v436
  %v1388 = vunpack.c.l.b16 %v437
  %v1389 = vunpack.c.l.b16 %v438
  %v1390 = vunpack.c.l.b16 %v439
  %v1391 = vunpack.c.l.b16 %v440
  %v1392 = vunpack.c.l.b16 %v441
  %v1393 = vunpack.c.l.b16 %v442
  %v1394 = vunpack.c.l.b16 %v443
  %v1395 = vpack.c.b16 %v1380, %v1379
  %v1396 = vpack.c.b16 %v1382, %v1381
  %v1397 = vpack.c.b16 %v1384, %v1383
  %v1398 = vpack.c.b16 %v1386, %v1385
  %v1399 = vpack.c.b16 %v1388, %v1387
  %v1400 = vpack.c.b16 %v1390, %v1389
  %v1401 = vpack.c.b16 %v1392, %v1391
  %v1402 = vpack.c.b16 %v1394, %v1393
  %1411 = vmatpush.bf16.msra.mxu0 %v1402
  %1412 = vmatpush.bf16.msra.mxu0 %v1401
  %1413 = vmatpush.bf16.msra.mxu0 %v1400
  %1414 = vmatpush.bf16.msra.mxu0 %v1399
  %1415 = vmatpush.bf16.msra.mxu0 %v1398
  %1416 = vmatpush.bf16.msra.mxu0 %v1397
  %1417 = vmatpush.bf16.msra.mxu0 %v1396
  %1418 = vmatpush.bf16.msra.mxu0 %v1395
  %1419 = vmatmul.bf16.gmra.mxu0 %v1352
  %v1420 = vpop.f32.mrf.mxu0
  %v1421 = vadd.f32 %v1362, %v1420
  %v1422 = vpop.f32.mrf.mxu0
  %v1423 = vadd.f32 %v1362, %v1422
  %1424 = vmatmul.bf16.gmra.mxu0 %v1353
  %v1425 = vpop.f32.mrf.mxu0
  %v1426 = vadd.f32 %v1362, %v1425
  %v1427 = vpop.f32.mrf.mxu0
  %v1428 = vadd.f32 %v1362, %v1427
  %1429 = vmatmul.bf16.gmra.mxu0 %v1354
  %v1430 = vpop.f32.mrf.mxu0
  %v1431 = vadd.f32 %v1362, %v1430
  %v1432 = vpop.f32.mrf.mxu0
  %v1433 = vadd.f32 %v1362, %v1432
  %1434 = vmatmul.bf16.gmra.mxu0 %v1355
  %v1435 = vpop.f32.mrf.mxu0
  %v1436 = vadd.f32 %v1362, %v1435
  %v1437 = vpop.f32.mrf.mxu0
  %v1438 = vadd.f32 %v1362, %v1437
  %1439 = vmatmul.bf16.gmra.mxu0 %v1356
  %v1440 = vpop.f32.mrf.mxu0
  %v1441 = vadd.f32 %v1362, %v1440
  %v1442 = vpop.f32.mrf.mxu0
  %v1443 = vadd.f32 %v1362, %v1442
  %1444 = vmatmul.bf16.gmra.mxu0 %v1357
  %v1445 = vpop.f32.mrf.mxu0
  %v1446 = vadd.f32 %v1362, %v1445
  %v1447 = vpop.f32.mrf.mxu0
  %v1448 = vadd.f32 %v1362, %v1447
  %1449 = vmatmul.bf16.gmra.mxu0 %v1358
  %v1450 = vpop.f32.mrf.mxu0
  %v1451 = vadd.f32 %v1362, %v1450
  %v1452 = vpop.f32.mrf.mxu0
  %v1453 = vadd.f32 %v1362, %v1452
  %1454 = vmatmul.bf16.gmra.mxu0 %v1359
  %v1455 = vpop.f32.mrf.mxu0
  %v1456 = vadd.f32 %v1362, %v1455
  %v1457 = vpop.f32.mrf.mxu0
  %v1458 = vadd.f32 %v1362, %v1457
  %1459 = vmatmul.bf16.gmra.mxu0 %v1360
  %v1460 = vpop.f32.mrf.mxu0
  %v1461 = vadd.f32 %v1362, %v1460
  %v1462 = vpop.f32.mrf.mxu0
  %v1463 = vadd.f32 %v1362, %v1462
  %1464 = vmatmul.bf16.gmra.mxu0 %v1361
  %v1465 = vpop.f32.mrf.mxu0
  %v1466 = vadd.f32 %v1362, %v1465
  %v1467 = vpop.f32.mrf.mxu0
  %v1468 = vadd.f32 %v1362, %v1467
  %1469 = vdwg.mxu0
  %v1470 = vtanh.pop %v1421
  %v1471 = vtanh.pop %v1423
  %v1472 = vtanh.pop %v1426
  %v1473 = vtanh.pop %v1428
  %v1474 = vtanh.pop %v1431
  %v1475 = vtanh.pop %v1433
  %v1476 = vtanh.pop %v1436
  %v1477 = vtanh.pop %v1438
  %v1478 = vtanh.pop %v1441
  %v1479 = vtanh.pop %v1443
  %v1480 = vtanh.pop %v1446
  %v1481 = vtanh.pop %v1448
  %v1482 = vtanh.pop %v1451
  %v1483 = vtanh.pop %v1453
  %v1484 = vtanh.pop %v1456
  %v1485 = vtanh.pop %v1458
  %v1486 = vtanh.pop %v1461
  %v1487 = vtanh.pop %v1463
  %v1488 = vtanh.pop %v1466
  %v1489 = vtanh.pop %v1468
  %v1490 = vpack.c.bf16 %v1471, %v1470
  %v1491 = vpack.c.bf16 %v1473, %v1472
  %v1492 = vpack.c.bf16 %v1475, %v1474
  %v1493 = vpack.c.bf16 %v1477, %v1476
  %v1494 = vpack.c.bf16 %v1479, %v1478
  %v1495 = vpack.c.bf16 %v1481, %v1480
  %v1496 = vpack.c.bf16 %v1483, %v1482
  %v1497 = vpack.c.bf16 %v1485, %v1484
  %v1498 = vpack.c.bf16 %v1487, %v1486
  %v1499 = vpack.c.bf16 %v1489, %v1488
  %v1500 = vperm.slane %v462, 0
  %v1517 = vunpack.c.l.b16 %v444
  %v1518 = vunpack.c.l.b16 %v445
  %v1519 = vunpack.c.l.b16 %v446
  %v1520 = vunpack.c.l.b16 %v447
  %v1521 = vunpack.c.l.b16 %v448
  %v1522 = vunpack.c.l.b16 %v449
  %v1523 = vunpack.c.l.b16 %v450
  %v1524 = vunpack.c.l.b16 %v451
  %v1525 = vunpack.c.l.b16 %v452
  %v1526 = vunpack.c.l.b16 %v453
  %v1527 = vunpack.c.l.b16 %v454
  %v1528 = vunpack.c.l.b16 %v455
  %v1529 = vunpack.c.l.b16 %v456
  %v1530 = vunpack.c.l.b16 %v457
  %v1531 = vunpack.c.l.b16 %v458
  %v1532 = vunpack.c.l.b16 %v459
  %v1533 = vpack.c.b16 %v1518, %v1517
  %v1534 = vpack.c.b16 %v1520, %v1519
  %v1535 = vpack.c.b16 %v1522, %v1521
  %v1536 = vpack.c.b16 %v1524, %v1523
  %v1537 = vpack.c.b16 %v1526, %v1525
  %v1538 = vpack.c.b16 %v1528, %v1527
  %v1539 = vpack.c.b16 %v1530, %v1529
  %v1540 = vpack.c.b16 %v1532, %v1531
  %1549 = vmatpush.bf16.msra.mxu0 %v1540
  %1550 = vmatpush.bf16.msra.mxu0 %v1539
  %1551 = vmatpush.bf16.msra.mxu0 %v1538
  %1552 = vmatpush.bf16.msra.mxu0 %v1537
  %1553 = vmatpush.bf16.msra.mxu0 %v1536
  %1554 = vmatpush.bf16.msra.mxu0 %v1535
  %1555 = vmatpush.bf16.msra.mxu0 %v1534
  %1556 = vmatpush.bf16.msra.mxu0 %v1533
  %1557 = vmatmul.bf16.gmra.mxu0 %v1490
  %v1558 = vpop.f32.mrf.mxu0
  %v1559 = vadd.f32 %v1500, %v1558
  %v1560 = vpop.f32.mrf.mxu0
  %v1561 = vadd.f32 %v1500, %v1560
  %1562 = vmatmul.bf16.gmra.mxu0 %v1491
  %v1563 = vpop.f32.mrf.mxu0
  %v1564 = vadd.f32 %v1500, %v1563
  %v1565 = vpop.f32.mrf.mxu0
  %v1566 = vadd.f32 %v1500, %v1565
  %1567 = vmatmul.bf16.gmra.mxu0 %v1492
  %v1568 = vpop.f32.mrf.mxu0
  %v1569 = vadd.f32 %v1500, %v1568
  %v1570 = vpop.f32.mrf.mxu0
  %v1571 = vadd.f32 %v1500, %v1570
  %1572 = vmatmul.bf16.gmra.mxu0 %v1493
  %v1573 = vpop.f32.mrf.mxu0
  %v1574 = vadd.f32 %v1500, %v1573
  %v1575 = vpop.f32.mrf.mxu0
  %v1576 = vadd.f32 %v1500, %v1575
  %1577 = vmatmul.bf16.gmra.mxu0 %v1494
  %v1578 = vpop.f32.mrf.mxu0
  %v1579 = vadd.f32 %v1500, %v1578
  %v1580 = vpop.f32.mrf.mxu0
  %v1581 = vadd.f32 %v1500, %v1580
  %1582 = vmatmul.bf16.gmra.mxu0 %v1495
  %v1583 = vpop.f32.mrf.mxu0
  %v1584 = vadd.f32 %v1500, %v1583
  %v1585 = vpop.f32.mrf.mxu0
  %v1586 = vadd.f32 %v1500, %v1585
  %1587 = vmatmul.bf16.gmra.mxu0 %v1496
  %v1588 = vpop.f32.mrf.mxu0
  %v1589 = vadd.f32 %v1500, %v1588
  %v1590 = vpop.f32.mrf.mxu0
  %v1591 = vadd.f32 %v1500, %v1590
  %1592 = vmatmul.bf16.gmra.mxu0 %v1497
  %v1593 = vpop.f32.mrf.mxu0
  %v1594 = vadd.f32 %v1500, %v1593
  %v1595 = vpop.f32.mrf.mxu0
  %v1596 = vadd.f32 %v1500, %v1595
  %1597 = vmatmul.bf16.gmra.mxu0 %v1498
  %v1598 = vpop.f32.mrf.mxu0
  %v1599 = vadd.f32 %v1500, %v1598
  %v1600 = vpop.f32.mrf.mxu0
  %v1601 = vadd.f32 %v1500, %v1600
  %1602 = vmatmul.bf16.gmra.mxu0 %v1499
  %v1603 = vpop.f32.mrf.mxu0
  %v1604 = vadd.f32 %v1500, %v1603
  %v1605 = vpop.f32.mrf.mxu0
  %v1606 = vadd.f32 %v1500, %v1605
  %1607 = vdwg.mxu0
  %v1608 = vpack.c.bf16 %v1559, %v1559
  %v1609 = vpack.c.bf16 %v1561, %v1561
  %v1610 = vpack.c.bf16 %v1564, %v1564
  %v1611 = vpack.c.bf16 %v1566, %v1566
  %v1612 = vpack.c.bf16 %v1569, %v1569
  %v1613 = vpack.c.bf16 %v1571, %v1571
  %v1614 = vpack.c.bf16 %v1574, %v1574
  %v1615 = vpack.c.bf16 %v1576, %v1576
  %v1616 = vpack.c.bf16 %v1579, %v1579
  %v1617 = vpack.c.bf16 %v1581, %v1581
  %v1618 = vpack.c.bf16 %v1584, %v1584
  %v1619 = vpack.c.bf16 %v1586, %v1586
  %v1620 = vpack.c.bf16 %v1589, %v1589
  %v1621 = vpack.c.bf16 %v1591, %v1591
  %v1622 = vpack.c.bf16 %v1594, %v1594
  %v1623 = vpack.c.bf16 %v1596, %v1596
  %v1624 = vpack.c.bf16 %v1599, %v1599
  %v1625 = vpack.c.bf16 %v1601, %v1601
  %v1626 = vpack.c.bf16 %v1604, %v1604
  %v1627 = vpack.c.bf16 %v1606, %v1606
  %1628 = vst [vmem:[%s5] sm:$0xf] %v1608
  %1629 = vst [vmem:[%s5 + $0x4] sm:$0xf] %v1609
  %1630 = vst [vmem:[%s5 + $0x8] sm:$0xf] %v1610
  %1631 = vst [vmem:[%s5 + $0xc] sm:$0xf] %v1611
  %1632 = vst [vmem:[%s5 + $0x10] sm:$0xf] %v1612
  %1633 = vst [vmem:[%s5 + $0x14] sm:$0xf] %v1613
  %1634 = vst [vmem:[%s5 + $0x18] sm:$0xf] %v1614
  %1635 = vst [vmem:[%s5 + $0x1c] sm:$0xf] %v1615
  %1636 = vst [vmem:[%s5 + $0x20] sm:$0xf] %v1616
  %1637 = vst [vmem:[%s5 + $0x24] sm:$0xf] %v1617
  %1638 = vst [vmem:[%s5 + $0x28] sm:$0xf] %v1618
  %1639 = vst [vmem:[%s5 + $0x2c] sm:$0xf] %v1619
  %1640 = vst [vmem:[%s5 + $0x30] sm:$0xf] %v1620
  %1641 = vst [vmem:[%s5 + $0x34] sm:$0xf] %v1621
  %1642 = vst [vmem:[%s5 + $0x38] sm:$0xf] %v1622
  %1643 = vst [vmem:[%s5 + $0x3c] sm:$0xf] %v1623
  %1644 = vst [vmem:[%s5 + $0x40] sm:$0xf] %v1624
  %1645 = vst [vmem:[%s5 + $0x44] sm:$0xf] %v1625
  %1646 = vst [vmem:[%s5 + $0x48] sm:$0xf] %v1626
  %1647 = vst [vmem:[%s5 + $0x4c] sm:$0xf] %v1627
  // Predicated region
  $region18: #{_forward_core.1} parent=0 // pred_check
    _
  $region19: #{_forward_core.1} parent=0 // pred_check_branch
    %1649 = sbr.rel (0) target = $region21
  $region20: #{_forward_core.1} parent=0 // pred_region
    _
  $region21: #{_forward_core.1} parent=0 // pred_fallthru
    _
  // Predicated region
  $region22: #{_forward_core.1} parent=0 // pred_check
    _
  $region23: #{_forward_core.1} parent=0 // pred_check_branch
    %1651 = sbr.rel (0) target = $region25
  $region24: #{_forward_core.1} parent=0 // pred_region
    _
  $region25: #{_forward_core.1} parent=0 // pred_fallthru
    _
  // Predicated region
  $region26: #{_forward_core.1} parent=0 // pred_check
    _
  $region27: #{_forward_core.1} parent=0 // pred_check_branch
    %1653 = sbr.rel (0) target = $region29
  $region28: #{_forward_core.1} parent=0 // pred_region
    _
  $region29: #{_forward_core.1} parent=0 // pred_fallthru
    _
  // Predicated region
  $region30: #{_forward_core.1} parent=0 // pred_check
    _
  $region31: #{_forward_core.1} parent=0 // pred_check_branch
    %1655 = sbr.rel (0) target = $region33
  $region32: #{_forward_core.1} parent=0 // pred_region
    _
  $region33: #{_forward_core.1} parent=0 // pred_fallthru
    _

</llo_original>
